<compile_context>
chip_gen: v7x
topology: tpu7x:2x2x1
jax: 0.10.0
libtpu: 0.0.40
codegen_flags: <defaults>
</compile_context>

<pallas_src>
import functools
import math

import jax
import jax.numpy as jnp
from jax.experimental import pallas as pl
from jax.experimental.pallas import tpu as pltpu


# --------------------------------------------------------------------------
# helpers
# --------------------------------------------------------------------------
def _round_up(v, m):
    return (v + m - 1) // m * m


def _pad2d(a, rows, cols):
    return jnp.pad(a, ((0, rows - a.shape[0]), (0, cols - a.shape[1])))


def _choose_tiling(n):
    """adj row/contraction tile and padded node count (tile divides n_p)."""
    n_p = _round_up(n, 128)
    tile = min(512, n_p)          # 512-wide tiles reach ~85% of HBM roofline
    n_p = _round_up(n_p, tile)
    return tile, n_p


def _vmem_limit_bytes():
    """Per-generation VMEM budget: ~3/4 of physical capacity, capped.

    ~96 MiB on v5e/v6e (128 MiB physical), ~48 MiB on v7x (64 MiB physical).
    """
    try:
        cap = pltpu.get_tpu_info().vmem_capacity_bytes
    except Exception:
        cap = 64 * 1024 * 1024    # conservative fallback, safe on all chips
    return int(min(cap * 3 // 4, 112 * 1024 * 1024))


# --------------------------------------------------------------------------
# kernel 1: dense support matmul  s = x @ W   (f32 accumulation)
# --------------------------------------------------------------------------
def _support_kernel(x_ref, w_ref, o_ref):
    o_ref[...] = jnp.dot(
        x_ref[...], w_ref[...], preferred_element_type=jnp.float32
    ).astype(o_ref.dtype)


def _support_matmul(x_p, w_p, *, tile, out_dtype):
    n_p, f_in = x_p.shape
    f_out = w_p.shape[1]
    n_row = n_p // tile

    cost = pl.CostEstimate(
        flops=2 * n_p * f_in * f_out,
        transcendentals=0,
        bytes_accessed=(x_p.size * x_p.dtype.itemsize
                        + w_p.size * w_p.dtype.itemsize
                        + n_p * f_out * jnp.dtype(out_dtype).itemsize),
    )
    return pl.pallas_call(
        _support_kernel,
        out_shape=jax.ShapeDtypeStruct((n_p, f_out), out_dtype),
        grid=(n_row,),
        in_specs=[
            pl.BlockSpec((tile, f_in), lambda i: (i, 0)),     # streamed x rows
            pl.BlockSpec((f_in, f_out), lambda i: (0, 0)),    # resident weights
        ],
        out_specs=pl.BlockSpec((tile, f_out), lambda i: (i, 0)),
        compiler_params=pltpu.CompilerParams(
            dimension_semantics=("parallel",),
            vmem_limit_bytes=_vmem_limit_bytes(),
        ),
        cost_estimate=cost,
    )(x_p, w_p)


# --------------------------------------------------------------------------
# kernel 2: streamed SpMM + epilogue   out = maybe_relu(adj @ s + b)
# --------------------------------------------------------------------------
def _spmm_bias_kernel(adj_ref, s_ref, b_ref, o_ref, acc_ref, *, tk, apply_relu):
    k = pl.program_id(1)

    @pl.when(k == 0)
    def _():
        acc_ref[...] = jnp.zeros_like(acc_ref)

    # k-th (tk, F_out) row block of the VMEM-resident support matrix.
    start = pl.multiple_of(k * tk, tk)
    s_blk = s_ref[pl.ds(start, tk), :]
    acc_ref[...] += jnp.dot(adj_ref[...], s_blk,
                            preferred_element_type=jnp.float32)

    @pl.when(k == pl.num_programs(1) - 1)
    def _():
        y = acc_ref[...] + b_ref[...]          # f32 bias epilogue
        if apply_relu:                          # static flag
            y = jnp.maximum(y, 0.0)
        o_ref[...] = y.astype(o_ref.dtype)


def _spmm_bias(adj_p, s_p, b_p, *, tile, apply_relu, out_dtype):
    n_p = adj_p.shape[0]
    f_out = s_p.shape[1]
    n_row = n_p // tile
    n_k = n_p // tile

    kernel = functools.partial(_spmm_bias_kernel, tk=tile, apply_relu=apply_relu)
    cost = pl.CostEstimate(
        flops=2 * n_p * n_p * f_out,
        transcendentals=0,
        bytes_accessed=(adj_p.size * adj_p.dtype.itemsize
                        + s_p.size * s_p.dtype.itemsize
                        + b_p.size * b_p.dtype.itemsize
                        + n_p * f_out * jnp.dtype(out_dtype).itemsize),
    )
    return pl.pallas_call(
        kernel,
        out_shape=jax.ShapeDtypeStruct((n_p, f_out), out_dtype),
        grid=(n_row, n_k),
        in_specs=[
            # adj tiles: streamed from HBM, double-buffered by the pipeline.
            pl.BlockSpec((tile, tile), lambda i, k: (i, k)),
            # support: whole-resident (constant block index => fetched once).
            pl.BlockSpec((n_p, f_out), lambda i, k: (0, 0)),
            # bias: whole-resident (1, F_out) f32.
            pl.BlockSpec((1, f_out), lambda i, k: (0, 0)),
        ],
        # Output block constant along k => accumulator pattern, one lane-dense
        # writeback per row tile.
        out_specs=pl.BlockSpec((tile, f_out), lambda i, k: (i, 0)),
        scratch_shapes=[pltpu.VMEM((tile, f_out), jnp.float32)],
        compiler_params=pltpu.CompilerParams(
            # Row tiles are independent -> megacore-parallel on v7x.
            # Contraction axis carries the accumulator -> "arbitrary".
            dimension_semantics=("parallel", "arbitrary"),
            vmem_limit_bytes=_vmem_limit_bytes(),
        ),
        cost_estimate=cost,
    )(adj_p, s_p, b_p)


# --------------------------------------------------------------------------
# forward pass
# --------------------------------------------------------------------------
@jax.jit
def gcn_forward_padded(x_p, adj_p, w1_p, b1_p, w2_p, b2_p):
    """2-layer GCN forward on pre-padded / pre-cast operands.

    Returns the padded (N_p, C_p) float32 output; slice at the consumer.
    """
    n_p = adj_p.shape[0]
    tile = min(512, n_p)
    assert n_p % tile == 0, "pad N with prepare_gcn_operands first"
    cdt = adj_p.dtype

    # ---- layer 1: h = relu(adj @ (x @ W1) + b1) ----
    s1 = _support_matmul(x_p, w1_p, tile=tile, out_dtype=cdt)
    h = _spmm_bias(adj_p, s1, b1_p, tile=tile, apply_relu=True, out_dtype=cdt)

    # ---- layer 2: y = adj @ (h @ W2) + b2 ----
    s2 = _support_matmul(h, w2_p, tile=tile, out_dtype=cdt)
    y = _spmm_bias(adj_p, s2, b2_p, tile=tile, apply_relu=False,
                   out_dtype=jnp.float32)
    return y


def prepare_gcn_operands(x, adj, params, *, compute_dtype=jnp.bfloat16):
    """Pad to 128-multiples / tile-multiples and cast ONCE.

    adj and the weights are constant across forward calls in GCN training, so
    call this once and reuse the padded operands every step (the pad/cast of
    the N^2 adjacency would otherwise double HBM traffic on the hot path).
    Zero padding is exact: padded adj columns are zero, so padded rows /
    features never leak into the real (n, n_cls) output slice.
    """
    w1, b1, w2, b2 = params
    n = x.shape[0]
    f_in, n_hid = w1.shape
    n_cls = w2.shape[1]

    tile, n_p = _choose_tiling(n)
    f_p = _round_up(f_in, 128)
    h_p = _round_up(n_hid, 128)
    c_p = _round_up(n_cls, 128)

    x_p = _pad2d(x.astype(jnp.float32), n_p, f_p).astype(compute_dtype)
    adj_p = _pad2d(adj.astype(jnp.float32), n_p, n_p).astype(compute_dtype)
    w1_p = _pad2d(w1.astype(jnp.float32), f_p, h_p).astype(compute_dtype)
    w2_p = _pad2d(w2.astype(jnp.float32), h_p, c_p).astype(compute_dtype)
    b1_p = jnp.pad(b1.astype(jnp.float32), (0, h_p - n_hid)).reshape(1, h_p)
    b2_p = jnp.pad(b2.astype(jnp.float32), (0, c_p - n_cls)).reshape(1, c_p)
    return (x_p, adj_p, w1_p, b1_p, w2_p, b2_p), (n, n_cls)


def vanilla_gcn_forward(x, adj, params, *, compute_dtype=jnp.bfloat16):
    """Convenience wrapper: pad/cast, run the padded forward, slice back.

    compute_dtype: dtype of the MXU inputs (bfloat16 default = fast path;
    float32 for bit-faithful PyTorch semantics).  Accumulation and the
    bias/relu epilogue are always f32.
    """
    padded, (n, n_cls) = prepare_gcn_operands(
        x, adj, params, compute_dtype=compute_dtype)
    y_p = gcn_forward_padded(*padded)
    return y_p[:n, :n_cls]


def init_params(key, nfeat, nhid, nclass):
    """Deterministic init mirroring GraphConvolution.reset_parameters
    (uniform(-stdv, stdv) with stdv = 1/sqrt(out_features))."""
    k1, k2, k3, k4 = jax.random.split(key, 4)
    stdv1 = 1.0 / math.sqrt(nhid)
    stdv2 = 1.0 / math.sqrt(nclass)
    w1 = jax.random.uniform(k1, (nfeat, nhid), jnp.float32, -stdv1, stdv1)
    b1 = jax.random.uniform(k2, (nhid,), jnp.float32, -stdv1, stdv1)
    w2 = jax.random.uniform(k3, (nhid, nclass), jnp.float32, -stdv2, stdv2)
    b2 = jax.random.uniform(k4, (nclass,), jnp.float32, -stdv2, stdv2)
    return (w1, b1, w2, b2)


if __name__ == "__main__":
    key = jax.random.PRNGKey(0)
    kx, ka, kp = jax.random.split(key, 3)

    N, NFEAT, NHID, NCLASS = 8, 16, 32, 8

    x = jax.random.normal(kx, (N, NFEAT), jnp.float32)
    # symmetric normalized-ish adjacency (dense), self-loops included
    a = (jax.random.uniform(ka, (N, N)) > 0.5).astype(jnp.float32)
    adj = a + a.T + jnp.eye(N, dtype=jnp.float32)
    adj = adj / jnp.sum(adj, axis=1, keepdims=True)

    params = init_params(kp, NFEAT, NHID, NCLASS)
    w1, b1, w2, b2 = params

    # plain-JAX reference (matches the PyTorch forward)
    h_ref = jnp.maximum(adj @ (x @ w1) + b1, 0.0)
    y_ref = adj @ (h_ref @ w2) + b2

    # exact-semantics path: f32 MXU inputs
    out_f32 = vanilla_gcn_forward(x, adj, params, compute_dtype=jnp.float32)
    jax.block_until_ready(out_f32)
    assert out_f32.shape == (N, NCLASS)
    assert jnp.allclose(out_f32, y_ref, atol=1e-5, rtol=1e-5)

    # default fast path: bf16 MXU inputs, f32 accumulation + f32 epilogue
    out_bf16 = vanilla_gcn_forward(x, adj, params)
    jax.block_until_ready(out_bf16)
    assert out_bf16.shape == (N, NCLASS)
    assert jnp.allclose(out_bf16, y_ref, atol=5e-2, rtol=5e-2)

    print("KERNEL_OK")
</pallas_src>

<mosaic_0001>
module attributes {stable_mosaic.version = 11 : i64} {
  func.func @_support_kernel(%arg0: i32, %arg1: memref<128x128xf32, #tpu.memory_space<vmem>>, %arg2: memref<128x128xf32, #tpu.memory_space<vmem>>, %arg3: memref<128x128xf32, #tpu.memory_space<vmem>>) attributes {dimension_semantics = [#tpu.dimension_semantics<parallel>], iteration_bounds = array<i64: 1>, scalar_prefetch = 0 : i64, scratch_operands = 0 : i64, tpu.core_type = #tpu.core_type<tc>, window_params = [{transform_indices = @transform_0, window_bounds = array<i64: 128, 128>}, {pipeline_mode = #tpu.pipeline_mode<synchronous>, transform_indices = @transform_1, window_bounds = array<i64: 128, 128>}, {transform_indices = @transform_2, window_bounds = array<i64: 128, 128>}]} {
    %c0 = arith.constant 0 : index
    %c0_0 = arith.constant 0 : index
    %0 = vector.load %arg1[%c0, %c0_0] : memref<128x128xf32, #tpu.memory_space<vmem>>, vector<128x128xf32>
    %c0_1 = arith.constant 0 : index
    %c0_2 = arith.constant 0 : index
    %1 = vector.load %arg2[%c0_1, %c0_2] : memref<128x128xf32, #tpu.memory_space<vmem>>, vector<128x128xf32>
    %cst = arith.constant dense<0.000000e+00> : vector<128x128xf32>
    %2 = tpu.matmul %0, %1, %cst {dimension_numbers = #tpu.dot_dimension_numbers<[1], [0], [0], [1], [0, 0, 1, 1], [], []>} : vector<128x128xf32>, vector<128x128xf32>, vector<128x128xf32> -> vector<128x128xf32>
    %c0_3 = arith.constant 0 : index
    %c0_4 = arith.constant 0 : index
    %3 = vector.load %arg3[%c0_3, %c0_4] : memref<128x128xf32, #tpu.memory_space<vmem>>, vector<128x128xf32>
    tpu.vector_store %arg3[%c0_3, %c0_4], %2 {strides = array<i32>} : memref<128x128xf32, #tpu.memory_space<vmem>>, vector<128x128xf32>,
    return
  }
  func.func @transform_0(%arg0: i32) -> (i32, i32) {
    %c0_i32 = arith.constant 0 : i32
    %c0_i32_0 = arith.constant 0 : i32
    return %arg0, %c0_i32 : i32, i32
  }
  func.func @transform_1(%arg0: i32) -> (i32, i32) {
    %c0_i32 = arith.constant 0 : i32
    %c0_i32_0 = arith.constant 0 : i32
    %c0_i32_1 = arith.constant 0 : i32
    return %c0_i32, %c0_i32_0 : i32, i32
  }
  func.func @transform_2(%arg0: i32) -> (i32, i32) {
    %c0_i32 = arith.constant 0 : i32
    %c0_i32_0 = arith.constant 0 : i32
    return %arg0, %c0_i32 : i32, i32
  }
}

module attributes {stable_mosaic.version = 11 : i64} {
  func.func @_support_kernel(%arg0: i32, %arg1: memref<128x128xf32, #tpu.memory_space<vmem>>, %arg2: memref<128x128xf32, #tpu.memory_space<vmem>>, %arg3: memref<128x128xf32, #tpu.memory_space<vmem>>) attributes {dimension_semantics = [#tpu.dimension_semantics<parallel>], iteration_bounds = array<i64: 1>, scalar_prefetch = 0 : i64, scratch_operands = 0 : i64, tpu.core_type = #tpu.core_type<tc>, window_params = [{transform_indices = @transform_0, window_bounds = array<i64: 128, 128>}, {pipeline_mode = #tpu.pipeline_mode<synchronous>, transform_indices = @transform_1, window_bounds = array<i64: 128, 128>}, {transform_indices = @transform_2, window_bounds = array<i64: 128, 128>}]} {
    %c0 = arith.constant 0 : index
    %c0_0 = arith.constant 0 : index
    %0 = vector.load %arg1[%c0, %c0_0] : memref<128x128xf32, #tpu.memory_space<vmem>>, vector<128x128xf32>
    %c0_1 = arith.constant 0 : index
    %c0_2 = arith.constant 0 : index
    %1 = vector.load %arg2[%c0_1, %c0_2] : memref<128x128xf32, #tpu.memory_space<vmem>>, vector<128x128xf32>
    %cst = arith.constant dense<0.000000e+00> : vector<128x128xf32>
    %2 = tpu.matmul %0, %1, %cst {dimension_numbers = #tpu.dot_dimension_numbers<[1], [0], [0], [1], [0, 0, 1, 1], [], []>} : vector<128x128xf32>, vector<128x128xf32>, vector<128x128xf32> -> vector<128x128xf32>
    %c0_3 = arith.constant 0 : index
    %c0_4 = arith.constant 0 : index
    %3 = vector.load %arg3[%c0_3, %c0_4] : memref<128x128xf32, #tpu.memory_space<vmem>>, vector<128x128xf32>
    tpu.vector_store %arg3[%c0_3, %c0_4], %2 {strides = array<i32>} : memref<128x128xf32, #tpu.memory_space<vmem>>, vector<128x128xf32>,
    return
  }
  func.func @transform_0(%arg0: i32) -> (i32, i32) {
    %c0_i32 = arith.constant 0 : i32
    %c0_i32_0 = arith.constant 0 : i32
    return %arg0, %c0_i32 : i32, i32
  }
  func.func @transform_1(%arg0: i32) -> (i32, i32) {
    %c0_i32 = arith.constant 0 : i32
    %c0_i32_0 = arith.constant 0 : i32
    %c0_i32_1 = arith.constant 0 : i32
    return %c0_i32, %c0_i32_0 : i32, i32
  }
  func.func @transform_2(%arg0: i32) -> (i32, i32) {
    %c0_i32 = arith.constant 0 : i32
    %c0_i32_0 = arith.constant 0 : i32
    return %arg0, %c0_i32 : i32, i32
  }
}

module attributes {stable_mosaic.version = 11 : i64} {
  func.func @_spmm_bias_kernel(%arg0: i32, %arg1: i32, %arg2: memref<128x128xf32, #tpu.memory_space<vmem>>, %arg3: memref<128x128xf32, #tpu.memory_space<vmem>>, %arg4: memref<1x128xf32, #tpu.memory_space<vmem>>, %arg5: memref<128x128xf32, #tpu.memory_space<vmem>>, %arg6: memref<128x128xf32, #tpu.memory_space<vmem>>) attributes {dimension_semantics = [#tpu.dimension_semantics<parallel>, #tpu.dimension_semantics<arbitrary>], iteration_bounds = array<i64: 1, 1>, scalar_prefetch = 0 : i64, scratch_operands = 1 : i64, tpu.core_type = #tpu.core_type<tc>, window_params = [{transform_indices = @transform_0, window_bounds = array<i64: 128, 128>}, {pipeline_mode = #tpu.pipeline_mode<synchronous>, transform_indices = @transform_1, window_bounds = array<i64: 128, 128>}, {pipeline_mode = #tpu.pipeline_mode<synchronous>, transform_indices = @transform_2, window_bounds = array<i64: 1, 128>}, {transform_indices = @transform_3, window_bounds = array<i64: 128, 128>}]} {
    %c0_i32 = arith.constant 0 : i32
    %0 = arith.cmpi eq, %arg1, %c0_i32 : i32
    %1 = arith.extui %0 : i1 to i32
    %c0_i32_0 = arith.constant 0 : i32
    %2 = arith.cmpi ne, %1, %c0_i32_0 : i32
    scf.if %2 {
      %cst_9 = arith.constant 0.000000e+00 : f32
      %15 = vector.broadcast %cst_9 : f32 to vector<128x128xf32>
      %c0_10 = arith.constant 0 : index
      %c0_11 = arith.constant 0 : index
      %16 = vector.load %arg6[%c0_10, %c0_11] : memref<128x128xf32, #tpu.memory_space<vmem>>, vector<128x128xf32>
      tpu.vector_store %arg6[%c0_10, %c0_11], %15 {strides = array<i32>} : memref<128x128xf32, #tpu.memory_space<vmem>>, vector<128x128xf32>,
    } else {
    }
    %c128_i32 = arith.constant 128 : i32
    %3 = arith.muli %arg1, %c128_i32 : i32
    %4 = tpu.assume_multiple %3, 128 : i32
    %5 = arith.index_cast %4 : i32 to index
    %c0 = arith.constant 0 : index
    %6 = vector.load %arg3[%5, %c0] : memref<128x128xf32, #tpu.memory_space<vmem>>, vector<128x128xf32>
    %c0_1 = arith.constant 0 : index
    %c0_2 = arith.constant 0 : index
    %7 = vector.load %arg6[%c0_1, %c0_2] : memref<128x128xf32, #tpu.memory_space<vmem>>, vector<128x128xf32>
    %c0_3 = arith.constant 0 : index
    %c0_4 = arith.constant 0 : index
    %8 = vector.load %arg2[%c0_3, %c0_4] : memref<128x128xf32, #tpu.memory_space<vmem>>, vector<128x128xf32>
    %cst = arith.constant dense<0.000000e+00> : vector<128x128xf32>
    %9 = tpu.matmul %8, %6, %cst {dimension_numbers = #tpu.dot_dimension_numbers<[1], [0], [0], [1], [0, 0, 1, 1], [], []>} : vector<128x128xf32>, vector<128x128xf32>, vector<128x128xf32> -> vector<128x128xf32>
    %10 = arith.addf %7, %9 : vector<128x128xf32>
    %c0_5 = arith.constant 0 : index
    %c0_6 = arith.constant 0 : index
    %11 = vector.load %arg6[%c0_5, %c0_6] : memref<128x128xf32, #tpu.memory_space<vmem>>, vector<128x128xf32>
    tpu.vector_store %arg6[%c0_5, %c0_6], %10 {strides = array<i32>} : memref<128x128xf32, #tpu.memory_space<vmem>>, vector<128x128xf32>,
    %c0_i32_7 = arith.constant 0 : i32
    %12 = arith.cmpi eq, %arg1, %c0_i32_7 : i32
    %13 = arith.extui %12 : i1 to i32
    %c0_i32_8 = arith.constant 0 : i32
    %14 = arith.cmpi ne, %13, %c0_i32_8 : i32
    scf.if %14 {
      %c0_9 = arith.constant 0 : index
      %c0_10 = arith.constant 0 : index
      %15 = vector.load %arg6[%c0_9, %c0_10] : memref<128x128xf32, #tpu.memory_space<vmem>>, vector<128x128xf32>
      %c0_11 = arith.constant 0 : index
      %c0_12 = arith.constant 0 : index
      %16 = vector.load %arg4[%c0_11, %c0_12] : memref<1x128xf32, #tpu.memory_space<vmem>>, vector<1x128xf32>
      %17 = vector.broadcast %16 : vector<1x128xf32> to vector<128x128xf32>
      %18 = arith.addf %15, %17 : vector<128x128xf32>
      %c0_13 = arith.constant 0 : index
      %c0_14 = arith.constant 0 : index
      %19 = vector.load %arg5[%c0_13, %c0_14] : memref<128x128xf32, #tpu.memory_space<vmem>>, vector<128x128xf32>
      tpu.vector_store %arg5[%c0_13, %c0_14], %18 {strides = array<i32>} : memref<128x128xf32, #tpu.memory_space<vmem>>, vector<128x128xf32>,
    } else {
    }
    return
  }
  func.func @transform_0(%arg0: i32, %arg1: i32) -> (i32, i32) {
    %c0_i32 = arith.constant 0 : i32
    return %arg0, %arg1 : i32, i32
  }
  func.func @transform_1(%arg0: i32, %arg1: i32) -> (i32, i32) {
    %c0_i32 = arith.constant 0 : i32
    %c0_i32_0 = arith.constant 0 : i32
    %c0_i32_1 = arith.constant 0 : i32
    return %c0_i32, %c0_i32_0 : i32, i32
  }
  func.func @transform_2(%arg0: i32, %arg1: i32) -> (i32, i32) {
    %c0_i32 = arith.constant 0 : i32
    %c0_i32_0 = arith.constant 0 : i32
    %c0_i32_1 = arith.constant 0 : i32
    return %c0_i32, %c0_i32_0 : i32, i32
  }
  func.func @transform_3(%arg0: i32, %arg1: i32) -> (i32, i32) {
    %c0_i32 = arith.constant 0 : i32
    %c0_i32_0 = arith.constant 0 : i32
    return %arg0, %c0_i32 : i32, i32
  }
}

module attributes {stable_mosaic.version = 11 : i64} {
  func.func @_spmm_bias_kernel(%arg0: i32, %arg1: i32, %arg2: memref<128x128xf32, #tpu.memory_space<vmem>>, %arg3: memref<128x128xf32, #tpu.memory_space<vmem>>, %arg4: memref<1x128xf32, #tpu.memory_space<vmem>>, %arg5: memref<128x128xf32, #tpu.memory_space<vmem>>, %arg6: memref<128x128xf32, #tpu.memory_space<vmem>>) attributes {dimension_semantics = [#tpu.dimension_semantics<parallel>, #tpu.dimension_semantics<arbitrary>], iteration_bounds = array<i64: 1, 1>, scalar_prefetch = 0 : i64, scratch_operands = 1 : i64, tpu.core_type = #tpu.core_type<tc>, window_params = [{transform_indices = @transform_0, window_bounds = array<i64: 128, 128>}, {pipeline_mode = #tpu.pipeline_mode<synchronous>, transform_indices = @transform_1, window_bounds = array<i64: 128, 128>}, {pipeline_mode = #tpu.pipeline_mode<synchronous>, transform_indices = @transform_2, window_bounds = array<i64: 1, 128>}, {transform_indices = @transform_3, window_bounds = array<i64: 128, 128>}]} {
    %c0_i32 = arith.constant 0 : i32
    %0 = arith.cmpi eq, %arg1, %c0_i32 : i32
    %1 = arith.extui %0 : i1 to i32
    %c0_i32_0 = arith.constant 0 : i32
    %2 = arith.cmpi ne, %1, %c0_i32_0 : i32
    scf.if %2 {
      %cst_9 = arith.constant 0.000000e+00 : f32
      %15 = vector.broadcast %cst_9 : f32 to vector<128x128xf32>
      %c0_10 = arith.constant 0 : index
      %c0_11 = arith.constant 0 : index
      %16 = vector.load %arg6[%c0_10, %c0_11] : memref<128x128xf32, #tpu.memory_space<vmem>>, vector<128x128xf32>
      tpu.vector_store %arg6[%c0_10, %c0_11], %15 {strides = array<i32>} : memref<128x128xf32, #tpu.memory_space<vmem>>, vector<128x128xf32>,
    } else {
    }
    %c128_i32 = arith.constant 128 : i32
    %3 = arith.muli %arg1, %c128_i32 : i32
    %4 = tpu.assume_multiple %3, 128 : i32
    %5 = arith.index_cast %4 : i32 to index
    %c0 = arith.constant 0 : index
    %6 = vector.load %arg3[%5, %c0] : memref<128x128xf32, #tpu.memory_space<vmem>>, vector<128x128xf32>
    %c0_1 = arith.constant 0 : index
    %c0_2 = arith.constant 0 : index
    %7 = vector.load %arg6[%c0_1, %c0_2] : memref<128x128xf32, #tpu.memory_space<vmem>>, vector<128x128xf32>
    %c0_3 = arith.constant 0 : index
    %c0_4 = arith.constant 0 : index
    %8 = vector.load %arg2[%c0_3, %c0_4] : memref<128x128xf32, #tpu.memory_space<vmem>>, vector<128x128xf32>
    %cst = arith.constant dense<0.000000e+00> : vector<128x128xf32>
    %9 = tpu.matmul %8, %6, %cst {dimension_numbers = #tpu.dot_dimension_numbers<[1], [0], [0], [1], [0, 0, 1, 1], [], []>} : vector<128x128xf32>, vector<128x128xf32>, vector<128x128xf32> -> vector<128x128xf32>
    %10 = arith.addf %7, %9 : vector<128x128xf32>
    %c0_5 = arith.constant 0 : index
    %c0_6 = arith.constant 0 : index
    %11 = vector.load %arg6[%c0_5, %c0_6] : memref<128x128xf32, #tpu.memory_space<vmem>>, vector<128x128xf32>
    tpu.vector_store %arg6[%c0_5, %c0_6], %10 {strides = array<i32>} : memref<128x128xf32, #tpu.memory_space<vmem>>, vector<128x128xf32>,
    %c0_i32_7 = arith.constant 0 : i32
    %12 = arith.cmpi eq, %arg1, %c0_i32_7 : i32
    %13 = arith.extui %12 : i1 to i32
    %c0_i32_8 = arith.constant 0 : i32
    %14 = arith.cmpi ne, %13, %c0_i32_8 : i32
    scf.if %14 {
      %c0_9 = arith.constant 0 : index
      %c0_10 = arith.constant 0 : index
      %15 = vector.load %arg6[%c0_9, %c0_10] : memref<128x128xf32, #tpu.memory_space<vmem>>, vector<128x128xf32>
      %c0_11 = arith.constant 0 : index
      %c0_12 = arith.constant 0 : index
      %16 = vector.load %arg4[%c0_11, %c0_12] : memref<1x128xf32, #tpu.memory_space<vmem>>, vector<1x128xf32>
      %17 = vector.broadcast %16 : vector<1x128xf32> to vector<128x128xf32>
      %18 = arith.addf %15, %17 : vector<128x128xf32>
      %cst_13 = arith.constant 0.000000e+00 : f32
      %19 = vector.broadcast %cst_13 : f32 to vector<128x128xf32>
      %20 = arith.maximumf %18, %19 : vector<128x128xf32>
      %c0_14 = arith.constant 0 : index
      %c0_15 = arith.constant 0 : index
      %21 = vector.load %arg5[%c0_14, %c0_15] : memref<128x128xf32, #tpu.memory_space<vmem>>, vector<128x128xf32>
      tpu.vector_store %arg5[%c0_14, %c0_15], %20 {strides = array<i32>} : memref<128x128xf32, #tpu.memory_space<vmem>>, vector<128x128xf32>,
    } else {
    }
    return
  }
  func.func @transform_0(%arg0: i32, %arg1: i32) -> (i32, i32) {
    %c0_i32 = arith.constant 0 : i32
    return %arg0, %arg1 : i32, i32
  }
  func.func @transform_1(%arg0: i32, %arg1: i32) -> (i32, i32) {
    %c0_i32 = arith.constant 0 : i32
    %c0_i32_0 = arith.constant 0 : i32
    %c0_i32_1 = arith.constant 0 : i32
    return %c0_i32, %c0_i32_0 : i32, i32
  }
  func.func @transform_2(%arg0: i32, %arg1: i32) -> (i32, i32) {
    %c0_i32 = arith.constant 0 : i32
    %c0_i32_0 = arith.constant 0 : i32
    %c0_i32_1 = arith.constant 0 : i32
    return %c0_i32, %c0_i32_0 : i32, i32
  }
  func.func @transform_3(%arg0: i32, %arg1: i32) -> (i32, i32) {
    %c0_i32 = arith.constant 0 : i32
    %c0_i32_0 = arith.constant 0 : i32
    return %arg0, %c0_i32 : i32, i32
  }
}

</mosaic_0001>

<llo_original>
// kernel: gcn_forward_padded.6
$region0: #{gcn_forward_padded.6}
  #allocation0 [shape = 'u32[]', space=smem, size = 0x4, offset = 0x4, fixed_abs, tag = 'smem constant byte address 0x4 - core index']
  #allocation1 [shape = 'u32[144,128]{1,0:T(1,128)}', space=vmem, size = 0x12000, scoped, tag = 'internal scratch']
  %s0 = inlined_call_operand.vmem [shape: f32[128,128], index: 0, kind: input, shape index: {}]
  %s1 = inlined_call_operand.vmem [shape: f32[128,128], index: 1, kind: input, shape index: {}]
  %s2 = inlined_call_operand.vmem [shape: f32[128,128], index: 2, kind: output, shape index: {}]
  %s3 = sld [smem:[#allocation0]]
  $region18: #{gcn_forward_padded.6} parent=0
    _
  %s5 = ssub.s32 1, %s3
  %s6 = scalar_select 0, %s5, %s3
  // Predicated region
  $region2: #{gcn_forward_padded.6} parent=0 // pred_check
    _
  $region3: #{gcn_forward_padded.6} parent=0 // pred_check_branch
    %8 = sbr.rel (0) target = $region5
  $region4: #{gcn_forward_padded.6} parent=0 // pred_region
    _
  $region5: #{gcn_forward_padded.6} parent=0 // pred_fallthru
    _
  // Predicated region
  $region6: #{gcn_forward_padded.6} parent=0 // pred_check
    _
  $region7: #{gcn_forward_padded.6} parent=0 // pred_check_branch
    %10 = sbr.rel (0) target = $region9
  $region8: #{gcn_forward_padded.6} parent=0 // pred_region
    _
  $region9: #{gcn_forward_padded.6} parent=0 // pred_fallthru
    _
  %v11 = vld [vmem:[%s0] sm:$0xff]
  %v12 = vld [vmem:[%s0 + $0x8] sm:$0xff]
  %v13 = vld [vmem:[%s0 + $0x10] sm:$0xff]
  %v14 = vld [vmem:[%s0 + $0x18] sm:$0xff]
  %v15 = vld [vmem:[%s0 + $0x20] sm:$0xff]
  %v16 = vld [vmem:[%s0 + $0x28] sm:$0xff]
  %v17 = vld [vmem:[%s0 + $0x30] sm:$0xff]
  %v18 = vld [vmem:[%s0 + $0x38] sm:$0xff]
  %v19 = vld [vmem:[%s0 + $0x40] sm:$0xff]
  %v20 = vld [vmem:[%s0 + $0x48] sm:$0xff]
  %v21 = vld [vmem:[%s0 + $0x50] sm:$0xff]
  %v22 = vld [vmem:[%s0 + $0x58] sm:$0xff]
  %v23 = vld [vmem:[%s0 + $0x60] sm:$0xff]
  %v24 = vld [vmem:[%s0 + $0x68] sm:$0xff]
  %v25 = vld [vmem:[%s0 + $0x70] sm:$0xff]
  %v26 = vld [vmem:[%s0 + $0x78] sm:$0xff]
  %v27 = vld [vmem:[%s1] sm:$0xff]
  %v28 = vld [vmem:[%s1 + $0x8] sm:$0xff]
  %v29 = vld [vmem:[%s1 + $0x10] sm:$0xff]
  %v30 = vld [vmem:[%s1 + $0x18] sm:$0xff]
  %v31 = vld [vmem:[%s1 + $0x20] sm:$0xff]
  %v32 = vld [vmem:[%s1 + $0x28] sm:$0xff]
  %v33 = vld [vmem:[%s1 + $0x30] sm:$0xff]
  %v34 = vld [vmem:[%s1 + $0x38] sm:$0xff]
  %v35 = vld [vmem:[%s1 + $0x40] sm:$0xff]
  %v36 = vld [vmem:[%s1 + $0x48] sm:$0xff]
  %v37 = vld [vmem:[%s1 + $0x50] sm:$0xff]
  %v38 = vld [vmem:[%s1 + $0x58] sm:$0xff]
  %v39 = vld [vmem:[%s1 + $0x60] sm:$0xff]
  %v40 = vld [vmem:[%s1 + $0x68] sm:$0xff]
  %v41 = vld [vmem:[%s1 + $0x70] sm:$0xff]
  %v42 = vld [vmem:[%s1 + $0x78] sm:$0xff]
  %43 = vmatprep.subr.mxu0 0.0
  %44 = vmatpush1.msra.mxu0 %v27
  %45 = vmatprep.subr.mxu0 0.0
  %46 = vmatpush1.msra.mxu0 %v28
  %47 = vmatprep.subr.mxu0 0.0
  %48 = vmatpush1.msra.mxu0 %v29
  %49 = vmatprep.subr.mxu0 0.0
  %50 = vmatpush1.msra.mxu0 %v30
  %51 = vmatprep.subr.mxu0 0.0
  %52 = vmatpush1.msra.mxu0 %v31
  %53 = vmatprep.subr.mxu0 0.0
  %54 = vmatpush1.msra.mxu0 %v32
  %55 = vmatprep.subr.mxu0 0.0
  %56 = vmatpush1.msra.mxu0 %v33
  %57 = vmatprep.subr.mxu0 0.0
  %58 = vmatpush1.msra.mxu0 %v34
  %59 = vmatprep.subr.mxu0 0.0
  %60 = vmatpush1.msra.mxu0 %v35
  %61 = vmatprep.subr.mxu0 0.0
  %62 = vmatpush1.msra.mxu0 %v36
  %63 = vmatprep.subr.mxu0 0.0
  %64 = vmatpush1.msra.mxu0 %v37
  %65 = vmatprep.subr.mxu0 0.0
  %66 = vmatpush1.msra.mxu0 %v38
  %67 = vmatprep.subr.mxu0 0.0
  %68 = vmatpush1.msra.mxu0 %v39
  %69 = vmatprep.subr.mxu0 0.0
  %70 = vmatpush1.msra.mxu0 %v40
  %71 = vmatprep.subr.mxu0 0.0
  %72 = vmatpush1.msra.mxu0 %v41
  %73 = vmatprep.subr.mxu0 0.0
  %74 = vmatpush1.msra.mxu0 %v42
  %75 = vmatprep.subr.mxu0 0.0
  %76 = vmatpush1.msra.mxu0 0.0
  %77 = vmatprep.subr.mxu0 0.0
  %78 = vmatpush1.msra.mxu0 0.0
  %79 = vmatprep.subr.mxu0 0.0
  %80 = vmatpush1.msra.mxu0 0.0
  %81 = vmatprep.subr.mxu0 0.0
  %82 = vmatpush1.msra.mxu0 0.0
  %83 = vmatprep.subr.mxu0 0.0
  %84 = vmatpush1.msra.mxu0 0.0
  %85 = vmatprep.subr.mxu0 0.0
  %86 = vmatpush1.msra.mxu0 0.0
  %87 = vmatprep.subr.mxu0 0.0
  %88 = vmatpush1.msra.mxu0 0.0
  %89 = vmatprep.subr.mxu0 0.0
  %90 = vmatpush1.msra.mxu0 0.0
  %91 = vmatprep.subr.mxu0 0.0
  %92 = vmatpush1.msra.mxu0 0.0
  %93 = vmatprep.subr.mxu0 0.0
  %94 = vmatpush1.msra.mxu0 0.0
  %95 = vmatprep.subr.mxu0 0.0
  %96 = vmatpush1.msra.mxu0 0.0
  %97 = vmatprep.subr.mxu0 0.0
  %98 = vmatpush1.msra.mxu0 0.0
  %99 = vmatprep.subr.mxu0 0.0
  %100 = vmatpush1.msra.mxu0 0.0
  %101 = vmatprep.subr.mxu0 0.0
  %102 = vmatpush1.msra.mxu0 0.0
  %103 = vmatprep.subr.mxu0 0.0
  %104 = vmatpush1.msra.mxu0 0.0
  %105 = vmatprep.subr.mxu0 0.0
  %106 = vmatpush1.msra.mxu0 0.0
  %107 = vmatprep.mubr.f32.mxu0 0.0
  %108 = vmatmul.mubr.f32.gmra.mrb[0].mxu0 %v11
  %v109 = vpop.f32.mrb[0].mxu0
  %v110 = vadd.f32 0.0, %v109
  %v111 = vpop.f32.mrb[0].mxu0
  %112 = vmatprep.mubr.f32.mxu0 0.0
  %113 = vmatmul.mubr.f32.gmra.mrb[0].mxu0 %v12
  %v114 = vpop.f32.mrb[0].mxu0
  %v115 = vadd.f32 0.0, %v114
  %v116 = vpop.f32.mrb[0].mxu0
  %117 = vmatprep.mubr.f32.mxu0 0.0
  %118 = vmatmul.mubr.f32.gmra.mrb[0].mxu0 %v13
  %v119 = vpop.f32.mrb[0].mxu0
  %v120 = vadd.f32 0.0, %v119
  %v121 = vpop.f32.mrb[0].mxu0
  %122 = vmatprep.mubr.f32.mxu0 0.0
  %123 = vmatmul.mubr.f32.gmra.mrb[0].mxu0 %v14
  %v124 = vpop.f32.mrb[0].mxu0
  %v125 = vadd.f32 0.0, %v124
  %v126 = vpop.f32.mrb[0].mxu0
  %127 = vmatprep.mubr.f32.mxu0 0.0
  %128 = vmatmul.mubr.f32.gmra.mrb[0].mxu0 %v15
  %v129 = vpop.f32.mrb[0].mxu0
  %v130 = vadd.f32 0.0, %v129
  %v131 = vpop.f32.mrb[0].mxu0
  %132 = vmatprep.mubr.f32.mxu0 0.0
  %133 = vmatmul.mubr.f32.gmra.mrb[0].mxu0 %v16
  %v134 = vpop.f32.mrb[0].mxu0
  %v135 = vadd.f32 0.0, %v134
  %v136 = vpop.f32.mrb[0].mxu0
  %137 = vmatprep.mubr.f32.mxu0 0.0
  %138 = vmatmul.mubr.f32.gmra.mrb[0].mxu0 %v17
  %v139 = vpop.f32.mrb[0].mxu0
  %v140 = vadd.f32 0.0, %v139
  %v141 = vpop.f32.mrb[0].mxu0
  %142 = vmatprep.mubr.f32.mxu0 0.0
  %143 = vmatmul.mubr.f32.gmra.mrb[0].mxu0 %v18
  %v144 = vpop.f32.mrb[0].mxu0
  %v145 = vadd.f32 0.0, %v144
  %v146 = vpop.f32.mrb[0].mxu0
  %147 = vmatprep.mubr.f32.mxu0 0.0
  %148 = vmatmul.mubr.f32.gmra.mrb[0].mxu0 %v19
  %v149 = vpop.f32.mrb[0].mxu0
  %v150 = vadd.f32 0.0, %v149
  %v151 = vpop.f32.mrb[0].mxu0
  %152 = vmatprep.mubr.f32.mxu0 0.0
  %153 = vmatmul.mubr.f32.gmra.mrb[0].mxu0 %v20
  %v154 = vpop.f32.mrb[0].mxu0
  %v155 = vadd.f32 0.0, %v154
  %v156 = vpop.f32.mrb[0].mxu0
  %157 = vmatprep.mubr.f32.mxu0 0.0
  %158 = vmatmul.mubr.f32.gmra.mrb[0].mxu0 %v21
  %v159 = vpop.f32.mrb[0].mxu0
  %v160 = vadd.f32 0.0, %v159
  %v161 = vpop.f32.mrb[0].mxu0
  %162 = vmatprep.mubr.f32.mxu0 0.0
  %163 = vmatmul.mubr.f32.gmra.mrb[0].mxu0 %v22
  %v164 = vpop.f32.mrb[0].mxu0
  %v165 = vadd.f32 0.0, %v164
  %v166 = vpop.f32.mrb[0].mxu0
  %167 = vmatprep.mubr.f32.mxu0 0.0
  %168 = vmatmul.mubr.f32.gmra.mrb[0].mxu0 %v23
  %v169 = vpop.f32.mrb[0].mxu0
  %v170 = vadd.f32 0.0, %v169
  %v171 = vpop.f32.mrb[0].mxu0
  %172 = vmatprep.mubr.f32.mxu0 0.0
  %173 = vmatmul.mubr.f32.gmra.mrb[0].mxu0 %v24
  %v174 = vpop.f32.mrb[0].mxu0
  %v175 = vadd.f32 0.0, %v174
  %v176 = vpop.f32.mrb[0].mxu0
  %177 = vmatprep.mubr.f32.mxu0 0.0
  %178 = vmatmul.mubr.f32.gmra.mrb[0].mxu0 %v25
  %v179 = vpop.f32.mrb[0].mxu0
  %v180 = vadd.f32 0.0, %v179
  %v181 = vpop.f32.mrb[0].mxu0
  %182 = vmatprep.mubr.f32.mxu0 0.0
  %183 = vmatmul.mubr.f32.gmra.mrb[0].mxu0 %v26
  %v184 = vpop.f32.mrb[0].mxu0
  %v185 = vadd.f32 0.0, %v184
  %v186 = vpop.f32.mrb[0].mxu0
  %187 = vdwg.mxu0
  %188 = vst [vmem:[%s2] sm:$0xff] %v110
  %189 = vst [vmem:[%s2 + $0x8] sm:$0xff] %v115
  %190 = vst [vmem:[%s2 + $0x10] sm:$0xff] %v120
  %191 = vst [vmem:[%s2 + $0x18] sm:$0xff] %v125
  %192 = vst [vmem:[%s2 + $0x20] sm:$0xff] %v130
  %193 = vst [vmem:[%s2 + $0x28] sm:$0xff] %v135
  %194 = vst [vmem:[%s2 + $0x30] sm:$0xff] %v140
  %195 = vst [vmem:[%s2 + $0x38] sm:$0xff] %v145
  %196 = vst [vmem:[%s2 + $0x40] sm:$0xff] %v150
  %197 = vst [vmem:[%s2 + $0x48] sm:$0xff] %v155
  %198 = vst [vmem:[%s2 + $0x50] sm:$0xff] %v160
  %199 = vst [vmem:[%s2 + $0x58] sm:$0xff] %v165
  %200 = vst [vmem:[%s2 + $0x60] sm:$0xff] %v170
  %201 = vst [vmem:[%s2 + $0x68] sm:$0xff] %v175
  %202 = vst [vmem:[%s2 + $0x70] sm:$0xff] %v180
  %203 = vst [vmem:[%s2 + $0x78] sm:$0xff] %v185
  // Predicated region
  $region10: #{gcn_forward_padded.6} parent=0 // pred_check
    _
  $region11: #{gcn_forward_padded.6} parent=0 // pred_check_branch
    %205 = sbr.rel (0) target = $region13
  $region12: #{gcn_forward_padded.6} parent=0 // pred_region
    _
  $region13: #{gcn_forward_padded.6} parent=0 // pred_fallthru
    _
  // Predicated region
  $region14: #{gcn_forward_padded.6} parent=0 // pred_check
    _
  $region15: #{gcn_forward_padded.6} parent=0 // pred_check_branch
    %207 = sbr.rel (0) target = $region17
  $region16: #{gcn_forward_padded.6} parent=0 // pred_region
    _
  $region17: #{gcn_forward_padded.6} parent=0 // pred_fallthru
    _

// kernel: gcn_forward_padded.4
$region0: #{gcn_forward_padded.4}
  #allocation0 [shape = 'u32[]', space=smem, size = 0x4, offset = 0x4, fixed_abs, tag = 'smem constant byte address 0x4 - core index']
  #allocation1 [shape = 'u32[144,128]{1,0:T(1,128)}', space=vmem, size = 0x12000, scoped, tag = 'internal scratch']
  %s0 = inlined_call_operand.hbm [shape: f32[128,128], index: 0, kind: input, shape index: {}]
  %s1 = inlined_call_operand.hbm [shape: f32[128,128], index: 1, kind: input, shape index: {}]
  %s2 = inlined_call_operand.vmem [shape: f32[128,128], index: 2, kind: output, shape index: {}]
  %s3 = sld [smem:[#allocation0]]
  $region26: #{gcn_forward_padded.4} parent=0
    _
  %s5 = ssub.s32 1, %s3
  %s6 = scalar_select 0, %s5, %s3
  $region1: #{gcn_forward_padded.4} parent=0
    #allocation2 [shape = 'u8[65536]{0}', space=vmem, size = 0x10000, scoped, tag = 'input window, operand 0, single buffered']
    #allocation3 [shape = 's32[1]{0}', space=sflag, size = 0x4, scoped, tag = 'scoped memory for gcn_forward_padded.4']
    #allocation4 [shape = 'u8[65536]{0}', space=vmem, size = 0x10000, scoped, tag = 'input window, operand 1, single buffered']
    #allocation5 [shape = 's32[1]{0}', space=sflag, size = 0x4, scoped, tag = 'scoped memory for gcn_forward_padded.4']
    %7 = vsyncpa [#allocation3], 0
    %8 = vsyncpa [#allocation5], 0
    // Predicated region
    $region2: #{gcn_forward_padded.4} parent=1 // pred_check
      _
    $region3: #{gcn_forward_padded.4} parent=1 // pred_check_branch
      %10 = sbr.rel (0) target = $region5
    $region4: #{gcn_forward_padded.4} parent=1 // pred_region
      %s12 = ssub.s32 2048, 2048
      %13 = vsyncadd [#allocation3], %s12
      %s14 = sshll.u32 [#allocation2], 4
      %s15 = int_to_ptr.vmem [resolvable:$true] %s14
      %20 = dma.hbm_to_vmem [thread:$0]  %s0, 2048, %s15, [#allocation3], 128, 128, 8
    $region5: #{gcn_forward_padded.4} parent=1 // pred_fallthru
      _
    // Predicated region
    $region6: #{gcn_forward_padded.4} parent=1 // pred_check
      _
    $region7: #{gcn_forward_padded.4} parent=1 // pred_check_branch
      %22 = sbr.rel (0) target = $region9
    $region8: #{gcn_forward_padded.4} parent=1 // pred_region
      %s24 = ssub.s32 2048, 2048
      %25 = vsyncadd [#allocation5], %s24
      %s26 = sshll.u32 [#allocation4], 4
      %s27 = int_to_ptr.vmem [resolvable:$true] %s26
      %32 = dma.hbm_to_vmem [thread:$0]  %s1, 2048, %s27, [#allocation5], 128, 128, 8
    $region9: #{gcn_forward_padded.4} parent=1 // pred_fallthru
      _
    // Predicated region
    $region10: #{gcn_forward_padded.4} parent=1 // pred_check
      _
    $region11: #{gcn_forward_padded.4} parent=1 // pred_check_branch
      %34 = sbr.rel (0) target = $region13
    $region12: #{gcn_forward_padded.4} parent=1 // pred_region
      %35 = dma.done [#allocation3], 2048
    $region13: #{gcn_forward_padded.4} parent=1 // pred_fallthru
      _
    // Predicated region
    $region14: #{gcn_forward_padded.4} parent=1 // pred_check
      _
    $region15: #{gcn_forward_padded.4} parent=1 // pred_check_branch
      %37 = sbr.rel (0) target = $region17
    $region16: #{gcn_forward_padded.4} parent=1 // pred_region
      %38 = dma.done [#allocation5], 2048
    $region17: #{gcn_forward_padded.4} parent=1 // pred_fallthru
      _
    %v39 = vld [vmem:[#allocation2] sm:$0xff]
    %v40 = vld [vmem:[#allocation2 + $0x8] sm:$0xff]
    %v41 = vld [vmem:[#allocation2 + $0x10] sm:$0xff]
    %v42 = vld [vmem:[#allocation2 + $0x18] sm:$0xff]
    %v43 = vld [vmem:[#allocation2 + $0x20] sm:$0xff]
    %v44 = vld [vmem:[#allocation2 + $0x28] sm:$0xff]
    %v45 = vld [vmem:[#allocation2 + $0x30] sm:$0xff]
    %v46 = vld [vmem:[#allocation2 + $0x38] sm:$0xff]
    %v47 = vld [vmem:[#allocation2 + $0x40] sm:$0xff]
    %v48 = vld [vmem:[#allocation2 + $0x48] sm:$0xff]
    %v49 = vld [vmem:[#allocation2 + $0x50] sm:$0xff]
    %v50 = vld [vmem:[#allocation2 + $0x58] sm:$0xff]
    %v51 = vld [vmem:[#allocation2 + $0x60] sm:$0xff]
    %v52 = vld [vmem:[#allocation2 + $0x68] sm:$0xff]
    %v53 = vld [vmem:[#allocation2 + $0x70] sm:$0xff]
    %v54 = vld [vmem:[#allocation2 + $0x78] sm:$0xff]
    %v55 = vld [vmem:[#allocation4] sm:$0xff]
    %v56 = vld [vmem:[#allocation4 + $0x8] sm:$0xff]
    %v57 = vld [vmem:[#allocation4 + $0x10] sm:$0xff]
    %v58 = vld [vmem:[#allocation4 + $0x18] sm:$0xff]
    %v59 = vld [vmem:[#allocation4 + $0x20] sm:$0xff]
    %v60 = vld [vmem:[#allocation4 + $0x28] sm:$0xff]
    %v61 = vld [vmem:[#allocation4 + $0x30] sm:$0xff]
    %v62 = vld [vmem:[#allocation4 + $0x38] sm:$0xff]
    %v63 = vld [vmem:[#allocation4 + $0x40] sm:$0xff]
    %v64 = vld [vmem:[#allocation4 + $0x48] sm:$0xff]
    %v65 = vld [vmem:[#allocation4 + $0x50] sm:$0xff]
    %v66 = vld [vmem:[#allocation4 + $0x58] sm:$0xff]
    %v67 = vld [vmem:[#allocation4 + $0x60] sm:$0xff]
    %v68 = vld [vmem:[#allocation4 + $0x68] sm:$0xff]
    %v69 = vld [vmem:[#allocation4 + $0x70] sm:$0xff]
    %v70 = vld [vmem:[#allocation4 + $0x78] sm:$0xff]
    %71 = vmatprep.subr.mxu0 0.0
    %72 = vmatpush1.msra.mxu0 %v55
    %73 = vmatprep.subr.mxu0 0.0
    %74 = vmatpush1.msra.mxu0 %v56
    %75 = vmatprep.subr.mxu0 0.0
    %76 = vmatpush1.msra.mxu0 %v57
    %77 = vmatprep.subr.mxu0 0.0
    %78 = vmatpush1.msra.mxu0 %v58
    %79 = vmatprep.subr.mxu0 0.0
    %80 = vmatpush1.msra.mxu0 %v59
    %81 = vmatprep.subr.mxu0 0.0
    %82 = vmatpush1.msra.mxu0 %v60
    %83 = vmatprep.subr.mxu0 0.0
    %84 = vmatpush1.msra.mxu0 %v61
    %85 = vmatprep.subr.mxu0 0.0
    %86 = vmatpush1.msra.mxu0 %v62
    %87 = vmatprep.subr.mxu0 0.0
    %88 = vmatpush1.msra.mxu0 %v63
    %89 = vmatprep.subr.mxu0 0.0
    %90 = vmatpush1.msra.mxu0 %v64
    %91 = vmatprep.subr.mxu0 0.0
    %92 = vmatpush1.msra.mxu0 %v65
    %93 = vmatprep.subr.mxu0 0.0
    %94 = vmatpush1.msra.mxu0 %v66
    %95 = vmatprep.subr.mxu0 0.0
    %96 = vmatpush1.msra.mxu0 %v67
    %97 = vmatprep.subr.mxu0 0.0
    %98 = vmatpush1.msra.mxu0 %v68
    %99 = vmatprep.subr.mxu0 0.0
    %100 = vmatpush1.msra.mxu0 %v69
    %101 = vmatprep.subr.mxu0 0.0
    %102 = vmatpush1.msra.mxu0 %v70
    %103 = vmatprep.subr.mxu0 0.0
    %104 = vmatpush1.msra.mxu0 0.0
    %105 = vmatprep.subr.mxu0 0.0
    %106 = vmatpush1.msra.mxu0 0.0
    %107 = vmatprep.subr.mxu0 0.0
    %108 = vmatpush1.msra.mxu0 0.0
    %109 = vmatprep.subr.mxu0 0.0
    %110 = vmatpush1.msra.mxu0 0.0
    %111 = vmatprep.subr.mxu0 0.0
    %112 = vmatpush1.msra.mxu0 0.0
    %113 = vmatprep.subr.mxu0 0.0
    %114 = vmatpush1.msra.mxu0 0.0
    %115 = vmatprep.subr.mxu0 0.0
    %116 = vmatpush1.msra.mxu0 0.0
    %117 = vmatprep.subr.mxu0 0.0
    %118 = vmatpush1.msra.mxu0 0.0
    %119 = vmatprep.subr.mxu0 0.0
    %120 = vmatpush1.msra.mxu0 0.0
    %121 = vmatprep.subr.mxu0 0.0
    %122 = vmatpush1.msra.mxu0 0.0
    %123 = vmatprep.subr.mxu0 0.0
    %124 = vmatpush1.msra.mxu0 0.0
    %125 = vmatprep.subr.mxu0 0.0
    %126 = vmatpush1.msra.mxu0 0.0
    %127 = vmatprep.subr.mxu0 0.0
    %128 = vmatpush1.msra.mxu0 0.0
    %129 = vmatprep.subr.mxu0 0.0
    %130 = vmatpush1.msra.mxu0 0.0
    %131 = vmatprep.subr.mxu0 0.0
    %132 = vmatpush1.msra.mxu0 0.0
    %133 = vmatprep.subr.mxu0 0.0
    %134 = vmatpush1.msra.mxu0 0.0
    %135 = vmatprep.mubr.f32.mxu0 0.0
    %136 = vmatmul.mubr.f32.gmra.mrb[0].mxu0 %v39
    %v137 = vpop.f32.mrb[0].mxu0
    %v138 = vadd.f32 0.0, %v137
    %v139 = vpop.f32.mrb[0].mxu0
    %140 = vmatprep.mubr.f32.mxu0 0.0
    %141 = vmatmul.mubr.f32.gmra.mrb[0].mxu0 %v40
    %v142 = vpop.f32.mrb[0].mxu0
    %v143 = vadd.f32 0.0, %v142
    %v144 = vpop.f32.mrb[0].mxu0
    %145 = vmatprep.mubr.f32.mxu0 0.0
    %146 = vmatmul.mubr.f32.gmra.mrb[0].mxu0 %v41
    %v147 = vpop.f32.mrb[0].mxu0
    %v148 = vadd.f32 0.0, %v147
    %v149 = vpop.f32.mrb[0].mxu0
    %150 = vmatprep.mubr.f32.mxu0 0.0
    %151 = vmatmul.mubr.f32.gmra.mrb[0].mxu0 %v42
    %v152 = vpop.f32.mrb[0].mxu0
    %v153 = vadd.f32 0.0, %v152
    %v154 = vpop.f32.mrb[0].mxu0
    %155 = vmatprep.mubr.f32.mxu0 0.0
    %156 = vmatmul.mubr.f32.gmra.mrb[0].mxu0 %v43
    %v157 = vpop.f32.mrb[0].mxu0
    %v158 = vadd.f32 0.0, %v157
    %v159 = vpop.f32.mrb[0].mxu0
    %160 = vmatprep.mubr.f32.mxu0 0.0
    %161 = vmatmul.mubr.f32.gmra.mrb[0].mxu0 %v44
    %v162 = vpop.f32.mrb[0].mxu0
    %v163 = vadd.f32 0.0, %v162
    %v164 = vpop.f32.mrb[0].mxu0
    %165 = vmatprep.mubr.f32.mxu0 0.0
    %166 = vmatmul.mubr.f32.gmra.mrb[0].mxu0 %v45
    %v167 = vpop.f32.mrb[0].mxu0
    %v168 = vadd.f32 0.0, %v167
    %v169 = vpop.f32.mrb[0].mxu0
    %170 = vmatprep.mubr.f32.mxu0 0.0
    %171 = vmatmul.mubr.f32.gmra.mrb[0].mxu0 %v46
    %v172 = vpop.f32.mrb[0].mxu0
    %v173 = vadd.f32 0.0, %v172
    %v174 = vpop.f32.mrb[0].mxu0
    %175 = vmatprep.mubr.f32.mxu0 0.0
    %176 = vmatmul.mubr.f32.gmra.mrb[0].mxu0 %v47
    %v177 = vpop.f32.mrb[0].mxu0
    %v178 = vadd.f32 0.0, %v177
    %v179 = vpop.f32.mrb[0].mxu0
    %180 = vmatprep.mubr.f32.mxu0 0.0
    %181 = vmatmul.mubr.f32.gmra.mrb[0].mxu0 %v48
    %v182 = vpop.f32.mrb[0].mxu0
    %v183 = vadd.f32 0.0, %v182
    %v184 = vpop.f32.mrb[0].mxu0
    %185 = vmatprep.mubr.f32.mxu0 0.0
    %186 = vmatmul.mubr.f32.gmra.mrb[0].mxu0 %v49
    %v187 = vpop.f32.mrb[0].mxu0
    %v188 = vadd.f32 0.0, %v187
    %v189 = vpop.f32.mrb[0].mxu0
    %190 = vmatprep.mubr.f32.mxu0 0.0
    %191 = vmatmul.mubr.f32.gmra.mrb[0].mxu0 %v50
    %v192 = vpop.f32.mrb[0].mxu0
    %v193 = vadd.f32 0.0, %v192
    %v194 = vpop.f32.mrb[0].mxu0
    %195 = vmatprep.mubr.f32.mxu0 0.0
    %196 = vmatmul.mubr.f32.gmra.mrb[0].mxu0 %v51
    %v197 = vpop.f32.mrb[0].mxu0
    %v198 = vadd.f32 0.0, %v197
    %v199 = vpop.f32.mrb[0].mxu0
    %200 = vmatprep.mubr.f32.mxu0 0.0
    %201 = vmatmul.mubr.f32.gmra.mrb[0].mxu0 %v52
    %v202 = vpop.f32.mrb[0].mxu0
    %v203 = vadd.f32 0.0, %v202
    %v204 = vpop.f32.mrb[0].mxu0
    %205 = vmatprep.mubr.f32.mxu0 0.0
    %206 = vmatmul.mubr.f32.gmra.mrb[0].mxu0 %v53
    %v207 = vpop.f32.mrb[0].mxu0
    %v208 = vadd.f32 0.0, %v207
    %v209 = vpop.f32.mrb[0].mxu0
    %210 = vmatprep.mubr.f32.mxu0 0.0
    %211 = vmatmul.mubr.f32.gmra.mrb[0].mxu0 %v54
    %v212 = vpop.f32.mrb[0].mxu0
    %v213 = vadd.f32 0.0, %v212
    %v214 = vpop.f32.mrb[0].mxu0
    %215 = vdwg.mxu0
    %216 = vst [vmem:[%s2] sm:$0xff] %v138
    %217 = vst [vmem:[%s2 + $0x8] sm:$0xff] %v143
    %218 = vst [vmem:[%s2 + $0x10] sm:$0xff] %v148
    %219 = vst [vmem:[%s2 + $0x18] sm:$0xff] %v153
    %220 = vst [vmem:[%s2 + $0x20] sm:$0xff] %v158
    %221 = vst [vmem:[%s2 + $0x28] sm:$0xff] %v163
    %222 = vst [vmem:[%s2 + $0x30] sm:$0xff] %v168
    %223 = vst [vmem:[%s2 + $0x38] sm:$0xff] %v173
    %224 = vst [vmem:[%s2 + $0x40] sm:$0xff] %v178
    %225 = vst [vmem:[%s2 + $0x48] sm:$0xff] %v183
    %226 = vst [vmem:[%s2 + $0x50] sm:$0xff] %v188
    %227 = vst [vmem:[%s2 + $0x58] sm:$0xff] %v193
    %228 = vst [vmem:[%s2 + $0x60] sm:$0xff] %v198
    %229 = vst [vmem:[%s2 + $0x68] sm:$0xff] %v203
    %230 = vst [vmem:[%s2 + $0x70] sm:$0xff] %v208
    %231 = vst [vmem:[%s2 + $0x78] sm:$0xff] %v213
    // Predicated region
    $region18: #{gcn_forward_padded.4} parent=1 // pred_check
      _
    $region19: #{gcn_forward_padded.4} parent=1 // pred_check_branch
      %233 = sbr.rel (0) target = $region21
    $region20: #{gcn_forward_padded.4} parent=1 // pred_region
      _
    $region21: #{gcn_forward_padded.4} parent=1 // pred_fallthru
      _
    // Predicated region
    $region22: #{gcn_forward_padded.4} parent=1 // pred_check
      _
    $region23: #{gcn_forward_padded.4} parent=1 // pred_check_branch
      %235 = sbr.rel (0) target = $region25
    $region24: #{gcn_forward_padded.4} parent=1 // pred_region
      _
    $region25: #{gcn_forward_padded.4} parent=1 // pred_fallthru
      _
    %236 = vsyncpa [#allocation3], 1
    %237 = vsyncpa [#allocation5], 1

// kernel: gcn_forward_padded.5
$region0: #{gcn_forward_padded.5}
  #allocation0 [shape = 'u32[]', space=smem, size = 0x4, offset = 0x4, fixed_abs, tag = 'smem constant byte address 0x4 - core index']
  #allocation1 [shape = 'u32[144,128]{1,0:T(1,128)}', space=vmem, size = 0x12000, scoped, tag = 'internal scratch']
  #allocation2 [shape = 'f32[128,128]{1,0:T(8,128)}', space=vmem, size = 0x10000, scoped, tag = 'scratch operand']
  %s0 = inlined_call_operand.vmem [shape: f32[128,128], index: 0, kind: input, shape index: {}]
  %s1 = inlined_call_operand.vmem [shape: f32[128,128], index: 1, kind: input, shape index: {}]
  %s2 = inlined_call_operand.vmem [shape: f32[1,128], index: 2, kind: input, shape index: {}]
  %s3 = inlined_call_operand.vmem [shape: f32[128,128], index: 3, kind: output, shape index: {}]
  %s4 = sld [smem:[#allocation0]]
  $region30: #{gcn_forward_padded.5} parent=0
    _
  %s6 = ssub.s32 1, %s4
  %s7 = scalar_select 0, %s6, %s4
  // Predicated region
  $region2: #{gcn_forward_padded.5} parent=0 // pred_check
    _
  $region3: #{gcn_forward_padded.5} parent=0 // pred_check_branch
    %9 = sbr.rel (0) target = $region5
  $region4: #{gcn_forward_padded.5} parent=0 // pred_region
    _
  $region5: #{gcn_forward_padded.5} parent=0 // pred_fallthru
    _
  // Predicated region
  $region6: #{gcn_forward_padded.5} parent=0 // pred_check
    _
  $region7: #{gcn_forward_padded.5} parent=0 // pred_check_branch
    %11 = sbr.rel (0) target = $region9
  $region8: #{gcn_forward_padded.5} parent=0 // pred_region
    _
  $region9: #{gcn_forward_padded.5} parent=0 // pred_fallthru
    _
  // Predicated region
  $region10: #{gcn_forward_padded.5} parent=0 // pred_check
    _
  $region11: #{gcn_forward_padded.5} parent=0 // pred_check_branch
    %13 = sbr.rel (0) target = $region13
  $region12: #{gcn_forward_padded.5} parent=0 // pred_region
    _
  $region13: #{gcn_forward_padded.5} parent=0 // pred_fallthru
    _
  %p14 = scmp.eq.s32.totalorder 0, 0
  // Predicated region
  $region14: #{gcn_forward_padded.5} parent=0 // pred_check
    %p15 = pneg %p14
  $region15: #{gcn_forward_padded.5} parent=0 // pred_check_branch
    %17 = sbr.rel (%p15) target = $region17
  $region16: #{gcn_forward_padded.5} parent=0 // pred_region
    %18 = vst [vmem:[#allocation2] sm:$0xff] 0.0
    %19 = vst [vmem:[#allocation2 + $0x8] sm:$0xff] 0.0
    %20 = vst [vmem:[#allocation2 + $0x10] sm:$0xff] 0.0
    %21 = vst [vmem:[#allocation2 + $0x18] sm:$0xff] 0.0
    %22 = vst [vmem:[#allocation2 + $0x20] sm:$0xff] 0.0
    %23 = vst [vmem:[#allocation2 + $0x28] sm:$0xff] 0.0
    %24 = vst [vmem:[#allocation2 + $0x30] sm:$0xff] 0.0
    %25 = vst [vmem:[#allocation2 + $0x38] sm:$0xff] 0.0
    %26 = vst [vmem:[#allocation2 + $0x40] sm:$0xff] 0.0
    %27 = vst [vmem:[#allocation2 + $0x48] sm:$0xff] 0.0
    %28 = vst [vmem:[#allocation2 + $0x50] sm:$0xff] 0.0
    %29 = vst [vmem:[#allocation2 + $0x58] sm:$0xff] 0.0
    %30 = vst [vmem:[#allocation2 + $0x60] sm:$0xff] 0.0
    %31 = vst [vmem:[#allocation2 + $0x68] sm:$0xff] 0.0
    %32 = vst [vmem:[#allocation2 + $0x70] sm:$0xff] 0.0
    %33 = vst [vmem:[#allocation2 + $0x78] sm:$0xff] 0.0
  $region17: #{gcn_forward_padded.5} parent=0 // pred_fallthru
    _
  %s34 = smul.u32 0, 128
  %s35 = scalar_lea.vmem %s1, %s34
  %v36 = vld [vmem:[%s35] sm:$0xff]
  %v37 = vld [vmem:[%s35 + $0x8] sm:$0xff]
  %v38 = vld [vmem:[%s35 + $0x10] sm:$0xff]
  %v39 = vld [vmem:[%s35 + $0x18] sm:$0xff]
  %v40 = vld [vmem:[%s35 + $0x20] sm:$0xff]
  %v41 = vld [vmem:[%s35 + $0x28] sm:$0xff]
  %v42 = vld [vmem:[%s35 + $0x30] sm:$0xff]
  %v43 = vld [vmem:[%s35 + $0x38] sm:$0xff]
  %v44 = vld [vmem:[%s35 + $0x40] sm:$0xff]
  %v45 = vld [vmem:[%s35 + $0x48] sm:$0xff]
  %v46 = vld [vmem:[%s35 + $0x50] sm:$0xff]
  %v47 = vld [vmem:[%s35 + $0x58] sm:$0xff]
  %v48 = vld [vmem:[%s35 + $0x60] sm:$0xff]
  %v49 = vld [vmem:[%s35 + $0x68] sm:$0xff]
  %v50 = vld [vmem:[%s35 + $0x70] sm:$0xff]
  %v51 = vld [vmem:[%s35 + $0x78] sm:$0xff]
  %v52 = vld [vmem:[#allocation2] sm:$0xff]
  %v53 = vld [vmem:[#allocation2 + $0x8] sm:$0xff]
  %v54 = vld [vmem:[#allocation2 + $0x10] sm:$0xff]
  %v55 = vld [vmem:[#allocation2 + $0x18] sm:$0xff]
  %v56 = vld [vmem:[#allocation2 + $0x20] sm:$0xff]
  %v57 = vld [vmem:[#allocation2 + $0x28] sm:$0xff]
  %v58 = vld [vmem:[#allocation2 + $0x30] sm:$0xff]
  %v59 = vld [vmem:[#allocation2 + $0x38] sm:$0xff]
  %v60 = vld [vmem:[#allocation2 + $0x40] sm:$0xff]
  %v61 = vld [vmem:[#allocation2 + $0x48] sm:$0xff]
  %v62 = vld [vmem:[#allocation2 + $0x50] sm:$0xff]
  %v63 = vld [vmem:[#allocation2 + $0x58] sm:$0xff]
  %v64 = vld [vmem:[#allocation2 + $0x60] sm:$0xff]
  %v65 = vld [vmem:[#allocation2 + $0x68] sm:$0xff]
  %v66 = vld [vmem:[#allocation2 + $0x70] sm:$0xff]
  %v67 = vld [vmem:[#allocation2 + $0x78] sm:$0xff]
  %v68 = vld [vmem:[%s0] sm:$0xff]
  %v69 = vld [vmem:[%s0 + $0x8] sm:$0xff]
  %v70 = vld [vmem:[%s0 + $0x10] sm:$0xff]
  %v71 = vld [vmem:[%s0 + $0x18] sm:$0xff]
  %v72 = vld [vmem:[%s0 + $0x20] sm:$0xff]
  %v73 = vld [vmem:[%s0 + $0x28] sm:$0xff]
  %v74 = vld [vmem:[%s0 + $0x30] sm:$0xff]
  %v75 = vld [vmem:[%s0 + $0x38] sm:$0xff]
  %v76 = vld [vmem:[%s0 + $0x40] sm:$0xff]
  %v77 = vld [vmem:[%s0 + $0x48] sm:$0xff]
  %v78 = vld [vmem:[%s0 + $0x50] sm:$0xff]
  %v79 = vld [vmem:[%s0 + $0x58] sm:$0xff]
  %v80 = vld [vmem:[%s0 + $0x60] sm:$0xff]
  %v81 = vld [vmem:[%s0 + $0x68] sm:$0xff]
  %v82 = vld [vmem:[%s0 + $0x70] sm:$0xff]
  %v83 = vld [vmem:[%s0 + $0x78] sm:$0xff]
  %84 = vmatprep.subr.mxu0 0.0
  %85 = vmatpush1.msra.mxu0 %v36
  %86 = vmatprep.subr.mxu0 0.0
  %87 = vmatpush1.msra.mxu0 %v37
  %88 = vmatprep.subr.mxu0 0.0
  %89 = vmatpush1.msra.mxu0 %v38
  %90 = vmatprep.subr.mxu0 0.0
  %91 = vmatpush1.msra.mxu0 %v39
  %92 = vmatprep.subr.mxu0 0.0
  %93 = vmatpush1.msra.mxu0 %v40
  %94 = vmatprep.subr.mxu0 0.0
  %95 = vmatpush1.msra.mxu0 %v41
  %96 = vmatprep.subr.mxu0 0.0
  %97 = vmatpush1.msra.mxu0 %v42
  %98 = vmatprep.subr.mxu0 0.0
  %99 = vmatpush1.msra.mxu0 %v43
  %100 = vmatprep.subr.mxu0 0.0
  %101 = vmatpush1.msra.mxu0 %v44
  %102 = vmatprep.subr.mxu0 0.0
  %103 = vmatpush1.msra.mxu0 %v45
  %104 = vmatprep.subr.mxu0 0.0
  %105 = vmatpush1.msra.mxu0 %v46
  %106 = vmatprep.subr.mxu0 0.0
  %107 = vmatpush1.msra.mxu0 %v47
  %108 = vmatprep.subr.mxu0 0.0
  %109 = vmatpush1.msra.mxu0 %v48
  %110 = vmatprep.subr.mxu0 0.0
  %111 = vmatpush1.msra.mxu0 %v49
  %112 = vmatprep.subr.mxu0 0.0
  %113 = vmatpush1.msra.mxu0 %v50
  %114 = vmatprep.subr.mxu0 0.0
  %115 = vmatpush1.msra.mxu0 %v51
  %116 = vmatprep.subr.mxu0 0.0
  %117 = vmatpush1.msra.mxu0 0.0
  %118 = vmatprep.subr.mxu0 0.0
  %119 = vmatpush1.msra.mxu0 0.0
  %120 = vmatprep.subr.mxu0 0.0
  %121 = vmatpush1.msra.mxu0 0.0
  %122 = vmatprep.subr.mxu0 0.0
  %123 = vmatpush1.msra.mxu0 0.0
  %124 = vmatprep.subr.mxu0 0.0
  %125 = vmatpush1.msra.mxu0 0.0
  %126 = vmatprep.subr.mxu0 0.0
  %127 = vmatpush1.msra.mxu0 0.0
  %128 = vmatprep.subr.mxu0 0.0
  %129 = vmatpush1.msra.mxu0 0.0
  %130 = vmatprep.subr.mxu0 0.0
  %131 = vmatpush1.msra.mxu0 0.0
  %132 = vmatprep.subr.mxu0 0.0
  %133 = vmatpush1.msra.mxu0 0.0
  %134 = vmatprep.subr.mxu0 0.0
  %135 = vmatpush1.msra.mxu0 0.0
  %136 = vmatprep.subr.mxu0 0.0
  %137 = vmatpush1.msra.mxu0 0.0
  %138 = vmatprep.subr.mxu0 0.0
  %139 = vmatpush1.msra.mxu0 0.0
  %140 = vmatprep.subr.mxu0 0.0
  %141 = vmatpush1.msra.mxu0 0.0
  %142 = vmatprep.subr.mxu0 0.0
  %143 = vmatpush1.msra.mxu0 0.0
  %144 = vmatprep.subr.mxu0 0.0
  %145 = vmatpush1.msra.mxu0 0.0
  %146 = vmatprep.subr.mxu0 0.0
  %147 = vmatpush1.msra.mxu0 0.0
  %148 = vmatprep.mubr.f32.mxu0 0.0
  %149 = vmatmul.mubr.f32.gmra.mrb[0].mxu0 %v68
  %v150 = vpop.f32.mrb[0].mxu0
  %v151 = vadd.f32 0.0, %v150
  %v152 = vpop.f32.mrb[0].mxu0
  %153 = vmatprep.mubr.f32.mxu0 0.0
  %154 = vmatmul.mubr.f32.gmra.mrb[0].mxu0 %v69
  %v155 = vpop.f32.mrb[0].mxu0
  %v156 = vadd.f32 0.0, %v155
  %v157 = vpop.f32.mrb[0].mxu0
  %158 = vmatprep.mubr.f32.mxu0 0.0
  %159 = vmatmul.mubr.f32.gmra.mrb[0].mxu0 %v70
  %v160 = vpop.f32.mrb[0].mxu0
  %v161 = vadd.f32 0.0, %v160
  %v162 = vpop.f32.mrb[0].mxu0
  %163 = vmatprep.mubr.f32.mxu0 0.0
  %164 = vmatmul.mubr.f32.gmra.mrb[0].mxu0 %v71
  %v165 = vpop.f32.mrb[0].mxu0
  %v166 = vadd.f32 0.0, %v165
  %v167 = vpop.f32.mrb[0].mxu0
  %168 = vmatprep.mubr.f32.mxu0 0.0
  %169 = vmatmul.mubr.f32.gmra.mrb[0].mxu0 %v72
  %v170 = vpop.f32.mrb[0].mxu0
  %v171 = vadd.f32 0.0, %v170
  %v172 = vpop.f32.mrb[0].mxu0
  %173 = vmatprep.mubr.f32.mxu0 0.0
  %174 = vmatmul.mubr.f32.gmra.mrb[0].mxu0 %v73
  %v175 = vpop.f32.mrb[0].mxu0
  %v176 = vadd.f32 0.0, %v175
  %v177 = vpop.f32.mrb[0].mxu0
  %178 = vmatprep.mubr.f32.mxu0 0.0
  %179 = vmatmul.mubr.f32.gmra.mrb[0].mxu0 %v74
  %v180 = vpop.f32.mrb[0].mxu0
  %v181 = vadd.f32 0.0, %v180
  %v182 = vpop.f32.mrb[0].mxu0
  %183 = vmatprep.mubr.f32.mxu0 0.0
  %184 = vmatmul.mubr.f32.gmra.mrb[0].mxu0 %v75
  %v185 = vpop.f32.mrb[0].mxu0
  %v186 = vadd.f32 0.0, %v185
  %v187 = vpop.f32.mrb[0].mxu0
  %188 = vmatprep.mubr.f32.mxu0 0.0
  %189 = vmatmul.mubr.f32.gmra.mrb[0].mxu0 %v76
  %v190 = vpop.f32.mrb[0].mxu0
  %v191 = vadd.f32 0.0, %v190
  %v192 = vpop.f32.mrb[0].mxu0
  %193 = vmatprep.mubr.f32.mxu0 0.0
  %194 = vmatmul.mubr.f32.gmra.mrb[0].mxu0 %v77
  %v195 = vpop.f32.mrb[0].mxu0
  %v196 = vadd.f32 0.0, %v195
  %v197 = vpop.f32.mrb[0].mxu0
  %198 = vmatprep.mubr.f32.mxu0 0.0
  %199 = vmatmul.mubr.f32.gmra.mrb[0].mxu0 %v78
  %v200 = vpop.f32.mrb[0].mxu0
  %v201 = vadd.f32 0.0, %v200
  %v202 = vpop.f32.mrb[0].mxu0
  %203 = vmatprep.mubr.f32.mxu0 0.0
  %204 = vmatmul.mubr.f32.gmra.mrb[0].mxu0 %v79
  %v205 = vpop.f32.mrb[0].mxu0
  %v206 = vadd.f32 0.0, %v205
  %v207 = vpop.f32.mrb[0].mxu0
  %208 = vmatprep.mubr.f32.mxu0 0.0
  %209 = vmatmul.mubr.f32.gmra.mrb[0].mxu0 %v80
  %v210 = vpop.f32.mrb[0].mxu0
  %v211 = vadd.f32 0.0, %v210
  %v212 = vpop.f32.mrb[0].mxu0
  %213 = vmatprep.mubr.f32.mxu0 0.0
  %214 = vmatmul.mubr.f32.gmra.mrb[0].mxu0 %v81
  %v215 = vpop.f32.mrb[0].mxu0
  %v216 = vadd.f32 0.0, %v215
  %v217 = vpop.f32.mrb[0].mxu0
  %218 = vmatprep.mubr.f32.mxu0 0.0
  %219 = vmatmul.mubr.f32.gmra.mrb[0].mxu0 %v82
  %v220 = vpop.f32.mrb[0].mxu0
  %v221 = vadd.f32 0.0, %v220
  %v222 = vpop.f32.mrb[0].mxu0
  %223 = vmatprep.mubr.f32.mxu0 0.0
  %224 = vmatmul.mubr.f32.gmra.mrb[0].mxu0 %v83
  %v225 = vpop.f32.mrb[0].mxu0
  %v226 = vadd.f32 0.0, %v225
  %v227 = vpop.f32.mrb[0].mxu0
  %228 = vdwg.mxu0
  %v229 = vadd.f32 %v52, %v151
  %v230 = vadd.f32 %v53, %v156
  %v231 = vadd.f32 %v54, %v161
  %v232 = vadd.f32 %v55, %v166
  %v233 = vadd.f32 %v56, %v171
  %v234 = vadd.f32 %v57, %v176
  %v235 = vadd.f32 %v58, %v181
  %v236 = vadd.f32 %v59, %v186
  %v237 = vadd.f32 %v60, %v191
  %v238 = vadd.f32 %v61, %v196
  %v239 = vadd.f32 %v62, %v201
  %v240 = vadd.f32 %v63, %v206
  %v241 = vadd.f32 %v64, %v211
  %v242 = vadd.f32 %v65, %v216
  %v243 = vadd.f32 %v66, %v221
  %v244 = vadd.f32 %v67, %v226
  %245 = vst [vmem:[#allocation2] sm:$0xff] %v229
  %246 = vst [vmem:[#allocation2 + $0x8] sm:$0xff] %v230
  %247 = vst [vmem:[#allocation2 + $0x10] sm:$0xff] %v231
  %248 = vst [vmem:[#allocation2 + $0x18] sm:$0xff] %v232
  %249 = vst [vmem:[#allocation2 + $0x20] sm:$0xff] %v233
  %250 = vst [vmem:[#allocation2 + $0x28] sm:$0xff] %v234
  %251 = vst [vmem:[#allocation2 + $0x30] sm:$0xff] %v235
  %252 = vst [vmem:[#allocation2 + $0x38] sm:$0xff] %v236
  %253 = vst [vmem:[#allocation2 + $0x40] sm:$0xff] %v237
  %254 = vst [vmem:[#allocation2 + $0x48] sm:$0xff] %v238
  %255 = vst [vmem:[#allocation2 + $0x50] sm:$0xff] %v239
  %256 = vst [vmem:[#allocation2 + $0x58] sm:$0xff] %v240
  %257 = vst [vmem:[#allocation2 + $0x60] sm:$0xff] %v241
  %258 = vst [vmem:[#allocation2 + $0x68] sm:$0xff] %v242
  %259 = vst [vmem:[#allocation2 + $0x70] sm:$0xff] %v243
  %260 = vst [vmem:[#allocation2 + $0x78] sm:$0xff] %v244
  // Predicated region
  $region18: #{gcn_forward_padded.5} parent=0 // pred_check
    %p261 = pneg %p14
  $region19: #{gcn_forward_padded.5} parent=0 // pred_check_branch
    %263 = sbr.rel (%p261) target = $region21
  $region20: #{gcn_forward_padded.5} parent=0 // pred_region
    %v264 = vld [vmem:[#allocation2] sm:$0xff]
    %v265 = vld [vmem:[#allocation2 + $0x8] sm:$0xff]
    %v266 = vld [vmem:[#allocation2 + $0x10] sm:$0xff]
    %v267 = vld [vmem:[#allocation2 + $0x18] sm:$0xff]
    %v268 = vld [vmem:[#allocation2 + $0x20] sm:$0xff]
    %v269 = vld [vmem:[#allocation2 + $0x28] sm:$0xff]
    %v270 = vld [vmem:[#allocation2 + $0x30] sm:$0xff]
    %v271 = vld [vmem:[#allocation2 + $0x38] sm:$0xff]
    %v272 = vld [vmem:[#allocation2 + $0x40] sm:$0xff]
    %v273 = vld [vmem:[#allocation2 + $0x48] sm:$0xff]
    %v274 = vld [vmem:[#allocation2 + $0x50] sm:$0xff]
    %v275 = vld [vmem:[#allocation2 + $0x58] sm:$0xff]
    %v276 = vld [vmem:[#allocation2 + $0x60] sm:$0xff]
    %v277 = vld [vmem:[#allocation2 + $0x68] sm:$0xff]
    %v278 = vld [vmem:[#allocation2 + $0x70] sm:$0xff]
    %v279 = vld [vmem:[#allocation2 + $0x78] sm:$0xff]
    %v280 = vld [vmem:[%s2] sm:$0x1]
    %v282 = vlaneseq
    %v283 = vshrl.u32 %v282, 7
    %v284 = vsub.s32 0, %v283
    %v285 = vrot.slane %v280, %v284
    %v287 = vadd.f32 %v264, %v285
    %v288 = vadd.f32 %v265, %v285
    %v289 = vadd.f32 %v266, %v285
    %v290 = vadd.f32 %v267, %v285
    %v291 = vadd.f32 %v268, %v285
    %v292 = vadd.f32 %v269, %v285
    %v293 = vadd.f32 %v270, %v285
    %v294 = vadd.f32 %v271, %v285
    %v295 = vadd.f32 %v272, %v285
    %v296 = vadd.f32 %v273, %v285
    %v297 = vadd.f32 %v274, %v285
    %v298 = vadd.f32 %v275, %v285
    %v299 = vadd.f32 %v276, %v285
    %v300 = vadd.f32 %v277, %v285
    %v301 = vadd.f32 %v278, %v285
    %v302 = vadd.f32 %v279, %v285
    %v303 = vmax.f32 %v287, 0.0
    %v304 = vmax.f32 %v288, 0.0
    %v305 = vmax.f32 %v289, 0.0
    %v306 = vmax.f32 %v290, 0.0
    %v307 = vmax.f32 %v291, 0.0
    %v308 = vmax.f32 %v292, 0.0
    %v309 = vmax.f32 %v293, 0.0
    %v310 = vmax.f32 %v294, 0.0
    %v311 = vmax.f32 %v295, 0.0
    %v312 = vmax.f32 %v296, 0.0
    %v313 = vmax.f32 %v297, 0.0
    %v314 = vmax.f32 %v298, 0.0
    %v315 = vmax.f32 %v299, 0.0
    %v316 = vmax.f32 %v300, 0.0
    %v317 = vmax.f32 %v301, 0.0
    %v318 = vmax.f32 %v302, 0.0
    %319 = vst [vmem:[%s3] sm:$0xff] %v303
    %320 = vst [vmem:[%s3 + $0x8] sm:$0xff] %v304
    %321 = vst [vmem:[%s3 + $0x10] sm:$0xff] %v305
    %322 = vst [vmem:[%s3 + $0x18] sm:$0xff] %v306
    %323 = vst [vmem:[%s3 + $0x20] sm:$0xff] %v307
    %324 = vst [vmem:[%s3 + $0x28] sm:$0xff] %v308
    %325 = vst [vmem:[%s3 + $0x30] sm:$0xff] %v309
    %326 = vst [vmem:[%s3 + $0x38] sm:$0xff] %v310
    %327 = vst [vmem:[%s3 + $0x40] sm:$0xff] %v311
    %328 = vst [vmem:[%s3 + $0x48] sm:$0xff] %v312
    %329 = vst [vmem:[%s3 + $0x50] sm:$0xff] %v313
    %330 = vst [vmem:[%s3 + $0x58] sm:$0xff] %v314
    %331 = vst [vmem:[%s3 + $0x60] sm:$0xff] %v315
    %332 = vst [vmem:[%s3 + $0x68] sm:$0xff] %v316
    %333 = vst [vmem:[%s3 + $0x70] sm:$0xff] %v317
    %334 = vst [vmem:[%s3 + $0x78] sm:$0xff] %v318
  $region21: #{gcn_forward_padded.5} parent=0 // pred_fallthru
    _
  // Predicated region
  $region22: #{gcn_forward_padded.5} parent=0 // pred_check
    _
  $region23: #{gcn_forward_padded.5} parent=0 // pred_check_branch
    %336 = sbr.rel (0) target = $region25
  $region24: #{gcn_forward_padded.5} parent=0 // pred_region
    _
  $region25: #{gcn_forward_padded.5} parent=0 // pred_fallthru
    _
  // Predicated region
  $region26: #{gcn_forward_padded.5} parent=0 // pred_check
    _
  $region27: #{gcn_forward_padded.5} parent=0 // pred_check_branch
    %338 = sbr.rel (0) target = $region29
  $region28: #{gcn_forward_padded.5} parent=0 // pred_region
    _
  $region29: #{gcn_forward_padded.5} parent=0 // pred_fallthru
    _

// kernel: gcn_forward_padded.7
$region0: #{gcn_forward_padded.7}
  #allocation0 [shape = 'u32[]', space=smem, size = 0x4, offset = 0x4, fixed_abs, tag = 'smem constant byte address 0x4 - core index']
  #allocation1 [shape = 'u32[144,128]{1,0:T(1,128)}', space=vmem, size = 0x12000, scoped, tag = 'internal scratch']
  #allocation2 [shape = 'f32[128,128]{1,0:T(8,128)}', space=vmem, size = 0x10000, scoped, tag = 'scratch operand']
  %s0 = inlined_call_operand.vmem [shape: f32[128,128], index: 0, kind: input, shape index: {}]
  %s1 = inlined_call_operand.vmem [shape: f32[128,128], index: 1, kind: input, shape index: {}]
  %s2 = inlined_call_operand.vmem [shape: f32[1,128], index: 2, kind: input, shape index: {}]
  %s3 = inlined_call_operand.hbm [shape: f32[128,128], index: 3, kind: output, shape index: {}]
  %s4 = sld [smem:[#allocation0]]
  $region30: #{gcn_forward_padded.7} parent=0
    _
  %s6 = ssub.s32 1, %s4
  %s7 = scalar_select 0, %s6, %s4
  $region1: #{gcn_forward_padded.7} parent=0
    #allocation3 [shape = 'u8[65536]{0}', space=vmem, size = 0x10000, scoped, tag = 'output window, operand 0, single buffered']
    #allocation4 [shape = 's32[1]{0}', space=sflag, size = 0x4, scoped, tag = 'scoped memory for gcn_forward_padded.7']
    %8 = vsyncpa [#allocation4], 0
    // Predicated region
    $region2: #{gcn_forward_padded.7} parent=1 // pred_check
      _
    $region3: #{gcn_forward_padded.7} parent=1 // pred_check_branch
      %10 = sbr.rel (0) target = $region5
    $region4: #{gcn_forward_padded.7} parent=1 // pred_region
      _
    $region5: #{gcn_forward_padded.7} parent=1 // pred_fallthru
      _
    // Predicated region
    $region6: #{gcn_forward_padded.7} parent=1 // pred_check
      _
    $region7: #{gcn_forward_padded.7} parent=1 // pred_check_branch
      %12 = sbr.rel (0) target = $region9
    $region8: #{gcn_forward_padded.7} parent=1 // pred_region
      _
    $region9: #{gcn_forward_padded.7} parent=1 // pred_fallthru
      _
    // Predicated region
    $region10: #{gcn_forward_padded.7} parent=1 // pred_check
      _
    $region11: #{gcn_forward_padded.7} parent=1 // pred_check_branch
      %14 = sbr.rel (0) target = $region13
    $region12: #{gcn_forward_padded.7} parent=1 // pred_region
      _
    $region13: #{gcn_forward_padded.7} parent=1 // pred_fallthru
      _
    %p15 = scmp.eq.s32.totalorder 0, 0
    // Predicated region
    $region14: #{gcn_forward_padded.7} parent=1 // pred_check
      %p16 = pneg %p15
    $region15: #{gcn_forward_padded.7} parent=1 // pred_check_branch
      %18 = sbr.rel (%p16) target = $region17
    $region16: #{gcn_forward_padded.7} parent=1 // pred_region
      %19 = vst [vmem:[#allocation2] sm:$0xff] 0.0
      %20 = vst [vmem:[#allocation2 + $0x8] sm:$0xff] 0.0
      %21 = vst [vmem:[#allocation2 + $0x10] sm:$0xff] 0.0
      %22 = vst [vmem:[#allocation2 + $0x18] sm:$0xff] 0.0
      %23 = vst [vmem:[#allocation2 + $0x20] sm:$0xff] 0.0
      %24 = vst [vmem:[#allocation2 + $0x28] sm:$0xff] 0.0
      %25 = vst [vmem:[#allocation2 + $0x30] sm:$0xff] 0.0
      %26 = vst [vmem:[#allocation2 + $0x38] sm:$0xff] 0.0
      %27 = vst [vmem:[#allocation2 + $0x40] sm:$0xff] 0.0
      %28 = vst [vmem:[#allocation2 + $0x48] sm:$0xff] 0.0
      %29 = vst [vmem:[#allocation2 + $0x50] sm:$0xff] 0.0
      %30 = vst [vmem:[#allocation2 + $0x58] sm:$0xff] 0.0
      %31 = vst [vmem:[#allocation2 + $0x60] sm:$0xff] 0.0
      %32 = vst [vmem:[#allocation2 + $0x68] sm:$0xff] 0.0
      %33 = vst [vmem:[#allocation2 + $0x70] sm:$0xff] 0.0
      %34 = vst [vmem:[#allocation2 + $0x78] sm:$0xff] 0.0
    $region17: #{gcn_forward_padded.7} parent=1 // pred_fallthru
      _
    %s35 = smul.u32 0, 128
    %s36 = scalar_lea.vmem %s1, %s35
    %v37 = vld [vmem:[%s36] sm:$0xff]
    %v38 = vld [vmem:[%s36 + $0x8] sm:$0xff]
    %v39 = vld [vmem:[%s36 + $0x10] sm:$0xff]
    %v40 = vld [vmem:[%s36 + $0x18] sm:$0xff]
    %v41 = vld [vmem:[%s36 + $0x20] sm:$0xff]
    %v42 = vld [vmem:[%s36 + $0x28] sm:$0xff]
    %v43 = vld [vmem:[%s36 + $0x30] sm:$0xff]
    %v44 = vld [vmem:[%s36 + $0x38] sm:$0xff]
    %v45 = vld [vmem:[%s36 + $0x40] sm:$0xff]
    %v46 = vld [vmem:[%s36 + $0x48] sm:$0xff]
    %v47 = vld [vmem:[%s36 + $0x50] sm:$0xff]
    %v48 = vld [vmem:[%s36 + $0x58] sm:$0xff]
    %v49 = vld [vmem:[%s36 + $0x60] sm:$0xff]
    %v50 = vld [vmem:[%s36 + $0x68] sm:$0xff]
    %v51 = vld [vmem:[%s36 + $0x70] sm:$0xff]
    %v52 = vld [vmem:[%s36 + $0x78] sm:$0xff]
    %v53 = vld [vmem:[#allocation2] sm:$0xff]
    %v54 = vld [vmem:[#allocation2 + $0x8] sm:$0xff]
    %v55 = vld [vmem:[#allocation2 + $0x10] sm:$0xff]
    %v56 = vld [vmem:[#allocation2 + $0x18] sm:$0xff]
    %v57 = vld [vmem:[#allocation2 + $0x20] sm:$0xff]
    %v58 = vld [vmem:[#allocation2 + $0x28] sm:$0xff]
    %v59 = vld [vmem:[#allocation2 + $0x30] sm:$0xff]
    %v60 = vld [vmem:[#allocation2 + $0x38] sm:$0xff]
    %v61 = vld [vmem:[#allocation2 + $0x40] sm:$0xff]
    %v62 = vld [vmem:[#allocation2 + $0x48] sm:$0xff]
    %v63 = vld [vmem:[#allocation2 + $0x50] sm:$0xff]
    %v64 = vld [vmem:[#allocation2 + $0x58] sm:$0xff]
    %v65 = vld [vmem:[#allocation2 + $0x60] sm:$0xff]
    %v66 = vld [vmem:[#allocation2 + $0x68] sm:$0xff]
    %v67 = vld [vmem:[#allocation2 + $0x70] sm:$0xff]
    %v68 = vld [vmem:[#allocation2 + $0x78] sm:$0xff]
    %v69 = vld [vmem:[%s0] sm:$0xff]
    %v70 = vld [vmem:[%s0 + $0x8] sm:$0xff]
    %v71 = vld [vmem:[%s0 + $0x10] sm:$0xff]
    %v72 = vld [vmem:[%s0 + $0x18] sm:$0xff]
    %v73 = vld [vmem:[%s0 + $0x20] sm:$0xff]
    %v74 = vld [vmem:[%s0 + $0x28] sm:$0xff]
    %v75 = vld [vmem:[%s0 + $0x30] sm:$0xff]
    %v76 = vld [vmem:[%s0 + $0x38] sm:$0xff]
    %v77 = vld [vmem:[%s0 + $0x40] sm:$0xff]
    %v78 = vld [vmem:[%s0 + $0x48] sm:$0xff]
    %v79 = vld [vmem:[%s0 + $0x50] sm:$0xff]
    %v80 = vld [vmem:[%s0 + $0x58] sm:$0xff]
    %v81 = vld [vmem:[%s0 + $0x60] sm:$0xff]
    %v82 = vld [vmem:[%s0 + $0x68] sm:$0xff]
    %v83 = vld [vmem:[%s0 + $0x70] sm:$0xff]
    %v84 = vld [vmem:[%s0 + $0x78] sm:$0xff]
    %85 = vmatprep.subr.mxu0 0.0
    %86 = vmatpush1.msra.mxu0 %v37
    %87 = vmatprep.subr.mxu0 0.0
    %88 = vmatpush1.msra.mxu0 %v38
    %89 = vmatprep.subr.mxu0 0.0
    %90 = vmatpush1.msra.mxu0 %v39
    %91 = vmatprep.subr.mxu0 0.0
    %92 = vmatpush1.msra.mxu0 %v40
    %93 = vmatprep.subr.mxu0 0.0
    %94 = vmatpush1.msra.mxu0 %v41
    %95 = vmatprep.subr.mxu0 0.0
    %96 = vmatpush1.msra.mxu0 %v42
    %97 = vmatprep.subr.mxu0 0.0
    %98 = vmatpush1.msra.mxu0 %v43
    %99 = vmatprep.subr.mxu0 0.0
    %100 = vmatpush1.msra.mxu0 %v44
    %101 = vmatprep.subr.mxu0 0.0
    %102 = vmatpush1.msra.mxu0 %v45
    %103 = vmatprep.subr.mxu0 0.0
    %104 = vmatpush1.msra.mxu0 %v46
    %105 = vmatprep.subr.mxu0 0.0
    %106 = vmatpush1.msra.mxu0 %v47
    %107 = vmatprep.subr.mxu0 0.0
    %108 = vmatpush1.msra.mxu0 %v48
    %109 = vmatprep.subr.mxu0 0.0
    %110 = vmatpush1.msra.mxu0 %v49
    %111 = vmatprep.subr.mxu0 0.0
    %112 = vmatpush1.msra.mxu0 %v50
    %113 = vmatprep.subr.mxu0 0.0
    %114 = vmatpush1.msra.mxu0 %v51
    %115 = vmatprep.subr.mxu0 0.0
    %116 = vmatpush1.msra.mxu0 %v52
    %117 = vmatprep.subr.mxu0 0.0
    %118 = vmatpush1.msra.mxu0 0.0
    %119 = vmatprep.subr.mxu0 0.0
    %120 = vmatpush1.msra.mxu0 0.0
    %121 = vmatprep.subr.mxu0 0.0
    %122 = vmatpush1.msra.mxu0 0.0
    %123 = vmatprep.subr.mxu0 0.0
    %124 = vmatpush1.msra.mxu0 0.0
    %125 = vmatprep.subr.mxu0 0.0
    %126 = vmatpush1.msra.mxu0 0.0
    %127 = vmatprep.subr.mxu0 0.0
    %128 = vmatpush1.msra.mxu0 0.0
    %129 = vmatprep.subr.mxu0 0.0
    %130 = vmatpush1.msra.mxu0 0.0
    %131 = vmatprep.subr.mxu0 0.0
    %132 = vmatpush1.msra.mxu0 0.0
    %133 = vmatprep.subr.mxu0 0.0
    %134 = vmatpush1.msra.mxu0 0.0
    %135 = vmatprep.subr.mxu0 0.0
    %136 = vmatpush1.msra.mxu0 0.0
    %137 = vmatprep.subr.mxu0 0.0
    %138 = vmatpush1.msra.mxu0 0.0
    %139 = vmatprep.subr.mxu0 0.0
    %140 = vmatpush1.msra.mxu0 0.0
    %141 = vmatprep.subr.mxu0 0.0
    %142 = vmatpush1.msra.mxu0 0.0
    %143 = vmatprep.subr.mxu0 0.0
    %144 = vmatpush1.msra.mxu0 0.0
    %145 = vmatprep.subr.mxu0 0.0
    %146 = vmatpush1.msra.mxu0 0.0
    %147 = vmatprep.subr.mxu0 0.0
    %148 = vmatpush1.msra.mxu0 0.0
    %149 = vmatprep.mubr.f32.mxu0 0.0
    %150 = vmatmul.mubr.f32.gmra.mrb[0].mxu0 %v69
    %v151 = vpop.f32.mrb[0].mxu0
    %v152 = vadd.f32 0.0, %v151
    %v153 = vpop.f32.mrb[0].mxu0
    %154 = vmatprep.mubr.f32.mxu0 0.0
    %155 = vmatmul.mubr.f32.gmra.mrb[0].mxu0 %v70
    %v156 = vpop.f32.mrb[0].mxu0
    %v157 = vadd.f32 0.0, %v156
    %v158 = vpop.f32.mrb[0].mxu0
    %159 = vmatprep.mubr.f32.mxu0 0.0
    %160 = vmatmul.mubr.f32.gmra.mrb[0].mxu0 %v71
    %v161 = vpop.f32.mrb[0].mxu0
    %v162 = vadd.f32 0.0, %v161
    %v163 = vpop.f32.mrb[0].mxu0
    %164 = vmatprep.mubr.f32.mxu0 0.0
    %165 = vmatmul.mubr.f32.gmra.mrb[0].mxu0 %v72
    %v166 = vpop.f32.mrb[0].mxu0
    %v167 = vadd.f32 0.0, %v166
    %v168 = vpop.f32.mrb[0].mxu0
    %169 = vmatprep.mubr.f32.mxu0 0.0
    %170 = vmatmul.mubr.f32.gmra.mrb[0].mxu0 %v73
    %v171 = vpop.f32.mrb[0].mxu0
    %v172 = vadd.f32 0.0, %v171
    %v173 = vpop.f32.mrb[0].mxu0
    %174 = vmatprep.mubr.f32.mxu0 0.0
    %175 = vmatmul.mubr.f32.gmra.mrb[0].mxu0 %v74
    %v176 = vpop.f32.mrb[0].mxu0
    %v177 = vadd.f32 0.0, %v176
    %v178 = vpop.f32.mrb[0].mxu0
    %179 = vmatprep.mubr.f32.mxu0 0.0
    %180 = vmatmul.mubr.f32.gmra.mrb[0].mxu0 %v75
    %v181 = vpop.f32.mrb[0].mxu0
    %v182 = vadd.f32 0.0, %v181
    %v183 = vpop.f32.mrb[0].mxu0
    %184 = vmatprep.mubr.f32.mxu0 0.0
    %185 = vmatmul.mubr.f32.gmra.mrb[0].mxu0 %v76
    %v186 = vpop.f32.mrb[0].mxu0
    %v187 = vadd.f32 0.0, %v186
    %v188 = vpop.f32.mrb[0].mxu0
    %189 = vmatprep.mubr.f32.mxu0 0.0
    %190 = vmatmul.mubr.f32.gmra.mrb[0].mxu0 %v77
    %v191 = vpop.f32.mrb[0].mxu0
    %v192 = vadd.f32 0.0, %v191
    %v193 = vpop.f32.mrb[0].mxu0
    %194 = vmatprep.mubr.f32.mxu0 0.0
    %195 = vmatmul.mubr.f32.gmra.mrb[0].mxu0 %v78
    %v196 = vpop.f32.mrb[0].mxu0
    %v197 = vadd.f32 0.0, %v196
    %v198 = vpop.f32.mrb[0].mxu0
    %199 = vmatprep.mubr.f32.mxu0 0.0
    %200 = vmatmul.mubr.f32.gmra.mrb[0].mxu0 %v79
    %v201 = vpop.f32.mrb[0].mxu0
    %v202 = vadd.f32 0.0, %v201
    %v203 = vpop.f32.mrb[0].mxu0
    %204 = vmatprep.mubr.f32.mxu0 0.0
    %205 = vmatmul.mubr.f32.gmra.mrb[0].mxu0 %v80
    %v206 = vpop.f32.mrb[0].mxu0
    %v207 = vadd.f32 0.0, %v206
    %v208 = vpop.f32.mrb[0].mxu0
    %209 = vmatprep.mubr.f32.mxu0 0.0
    %210 = vmatmul.mubr.f32.gmra.mrb[0].mxu0 %v81
    %v211 = vpop.f32.mrb[0].mxu0
    %v212 = vadd.f32 0.0, %v211
    %v213 = vpop.f32.mrb[0].mxu0
    %214 = vmatprep.mubr.f32.mxu0 0.0
    %215 = vmatmul.mubr.f32.gmra.mrb[0].mxu0 %v82
    %v216 = vpop.f32.mrb[0].mxu0
    %v217 = vadd.f32 0.0, %v216
    %v218 = vpop.f32.mrb[0].mxu0
    %219 = vmatprep.mubr.f32.mxu0 0.0
    %220 = vmatmul.mubr.f32.gmra.mrb[0].mxu0 %v83
    %v221 = vpop.f32.mrb[0].mxu0
    %v222 = vadd.f32 0.0, %v221
    %v223 = vpop.f32.mrb[0].mxu0
    %224 = vmatprep.mubr.f32.mxu0 0.0
    %225 = vmatmul.mubr.f32.gmra.mrb[0].mxu0 %v84
    %v226 = vpop.f32.mrb[0].mxu0
    %v227 = vadd.f32 0.0, %v226
    %v228 = vpop.f32.mrb[0].mxu0
    %229 = vdwg.mxu0
    %v230 = vadd.f32 %v53, %v152
    %v231 = vadd.f32 %v54, %v157
    %v232 = vadd.f32 %v55, %v162
    %v233 = vadd.f32 %v56, %v167
    %v234 = vadd.f32 %v57, %v172
    %v235 = vadd.f32 %v58, %v177
    %v236 = vadd.f32 %v59, %v182
    %v237 = vadd.f32 %v60, %v187
    %v238 = vadd.f32 %v61, %v192
    %v239 = vadd.f32 %v62, %v197
    %v240 = vadd.f32 %v63, %v202
    %v241 = vadd.f32 %v64, %v207
    %v242 = vadd.f32 %v65, %v212
    %v243 = vadd.f32 %v66, %v217
    %v244 = vadd.f32 %v67, %v222
    %v245 = vadd.f32 %v68, %v227
    %246 = vst [vmem:[#allocation2] sm:$0xff] %v230
    %247 = vst [vmem:[#allocation2 + $0x8] sm:$0xff] %v231
    %248 = vst [vmem:[#allocation2 + $0x10] sm:$0xff] %v232
    %249 = vst [vmem:[#allocation2 + $0x18] sm:$0xff] %v233
    %250 = vst [vmem:[#allocation2 + $0x20] sm:$0xff] %v234
    %251 = vst [vmem:[#allocation2 + $0x28] sm:$0xff] %v235
    %252 = vst [vmem:[#allocation2 + $0x30] sm:$0xff] %v236
    %253 = vst [vmem:[#allocation2 + $0x38] sm:$0xff] %v237
    %254 = vst [vmem:[#allocation2 + $0x40] sm:$0xff] %v238
    %255 = vst [vmem:[#allocation2 + $0x48] sm:$0xff] %v239
    %256 = vst [vmem:[#allocation2 + $0x50] sm:$0xff] %v240
    %257 = vst [vmem:[#allocation2 + $0x58] sm:$0xff] %v241
    %258 = vst [vmem:[#allocation2 + $0x60] sm:$0xff] %v242
    %259 = vst [vmem:[#allocation2 + $0x68] sm:$0xff] %v243
    %260 = vst [vmem:[#allocation2 + $0x70] sm:$0xff] %v244
    %261 = vst [vmem:[#allocation2 + $0x78] sm:$0xff] %v245
    // Predicated region
    $region18: #{gcn_forward_padded.7} parent=1 // pred_check
      %p262 = pneg %p15
    $region19: #{gcn_forward_padded.7} parent=1 // pred_check_branch
      %264 = sbr.rel (%p262) target = $region21
    $region20: #{gcn_forward_padded.7} parent=1 // pred_region
      %v265 = vld [vmem:[#allocation2] sm:$0xff]
      %v266 = vld [vmem:[#allocation2 + $0x8] sm:$0xff]
      %v267 = vld [vmem:[#allocation2 + $0x10] sm:$0xff]
      %v268 = vld [vmem:[#allocation2 + $0x18] sm:$0xff]
      %v269 = vld [vmem:[#allocation2 + $0x20] sm:$0xff]
      %v270 = vld [vmem:[#allocation2 + $0x28] sm:$0xff]
      %v271 = vld [vmem:[#allocation2 + $0x30] sm:$0xff]
      %v272 = vld [vmem:[#allocation2 + $0x38] sm:$0xff]
      %v273 = vld [vmem:[#allocation2 + $0x40] sm:$0xff]
      %v274 = vld [vmem:[#allocation2 + $0x48] sm:$0xff]
      %v275 = vld [vmem:[#allocation2 + $0x50] sm:$0xff]
      %v276 = vld [vmem:[#allocation2 + $0x58] sm:$0xff]
      %v277 = vld [vmem:[#allocation2 + $0x60] sm:$0xff]
      %v278 = vld [vmem:[#allocation2 + $0x68] sm:$0xff]
      %v279 = vld [vmem:[#allocation2 + $0x70] sm:$0xff]
      %v280 = vld [vmem:[#allocation2 + $0x78] sm:$0xff]
      %v281 = vld [vmem:[%s2] sm:$0x1]
      %v283 = vlaneseq
      %v284 = vshrl.u32 %v283, 7
      %v285 = vsub.s32 0, %v284
      %v286 = vrot.slane %v281, %v285
      %v288 = vadd.f32 %v265, %v286
      %v289 = vadd.f32 %v266, %v286
      %v290 = vadd.f32 %v267, %v286
      %v291 = vadd.f32 %v268, %v286
      %v292 = vadd.f32 %v269, %v286
      %v293 = vadd.f32 %v270, %v286
      %v294 = vadd.f32 %v271, %v286
      %v295 = vadd.f32 %v272, %v286
      %v296 = vadd.f32 %v273, %v286
      %v297 = vadd.f32 %v274, %v286
      %v298 = vadd.f32 %v275, %v286
      %v299 = vadd.f32 %v276, %v286
      %v300 = vadd.f32 %v277, %v286
      %v301 = vadd.f32 %v278, %v286
      %v302 = vadd.f32 %v279, %v286
      %v303 = vadd.f32 %v280, %v286
      %304 = vst [vmem:[#allocation3] sm:$0xff] %v288
      %305 = vst [vmem:[#allocation3 + $0x8] sm:$0xff] %v289
      %306 = vst [vmem:[#allocation3 + $0x10] sm:$0xff] %v290
      %307 = vst [vmem:[#allocation3 + $0x18] sm:$0xff] %v291
      %308 = vst [vmem:[#allocation3 + $0x20] sm:$0xff] %v292
      %309 = vst [vmem:[#allocation3 + $0x28] sm:$0xff] %v293
      %310 = vst [vmem:[#allocation3 + $0x30] sm:$0xff] %v294
      %311 = vst [vmem:[#allocation3 + $0x38] sm:$0xff] %v295
      %312 = vst [vmem:[#allocation3 + $0x40] sm:$0xff] %v296
      %313 = vst [vmem:[#allocation3 + $0x48] sm:$0xff] %v297
      %314 = vst [vmem:[#allocation3 + $0x50] sm:$0xff] %v298
      %315 = vst [vmem:[#allocation3 + $0x58] sm:$0xff] %v299
      %316 = vst [vmem:[#allocation3 + $0x60] sm:$0xff] %v300
      %317 = vst [vmem:[#allocation3 + $0x68] sm:$0xff] %v301
      %318 = vst [vmem:[#allocation3 + $0x70] sm:$0xff] %v302
      %319 = vst [vmem:[#allocation3 + $0x78] sm:$0xff] %v303
    $region21: #{gcn_forward_padded.7} parent=1 // pred_fallthru
      _
    // Predicated region
    $region22: #{gcn_forward_padded.7} parent=1 // pred_check
      _
    $region23: #{gcn_forward_padded.7} parent=1 // pred_check_branch
      %321 = sbr.rel (0) target = $region25
    $region24: #{gcn_forward_padded.7} parent=1 // pred_region
      %s323 = ssub.s32 2048, 2048
      %324 = vsyncadd [#allocation4], %s323
      %s325 = sshll.u32 [#allocation3], 4
      %s326 = int_to_ptr.vmem [resolvable:$true] %s325
      %331 = dma.vmem_to_hbm [thread:$0]  %s326, 2048, %s3, [#allocation4], 128, 128, 8
    $region25: #{gcn_forward_padded.7} parent=1 // pred_fallthru
      _
    // Predicated region
    $region26: #{gcn_forward_padded.7} parent=1 // pred_check
      _
    $region27: #{gcn_forward_padded.7} parent=1 // pred_check_branch
      %333 = sbr.rel (0) target = $region29
    $region28: #{gcn_forward_padded.7} parent=1 // pred_region
      %334 = dma.done [#allocation4], 2048
    $region29: #{gcn_forward_padded.7} parent=1 // pred_fallthru
      _
    %335 = vsyncpa [#allocation4], 1

</llo_original>
